<compile_context>
chip_gen: v6e
topology: v6e:2x2x1
jax: 0.10.0
libtpu: 0.0.40
codegen_flags: <defaults>
</compile_context>

<pallas_src>
import functools

import jax
import jax.numpy as jnp
from jax.experimental import pallas as pl
from jax.experimental.pallas import tpu as pltpu


_MXU_DTYPE = jnp.bfloat16      # MXU operand dtype; accumulation is always f32
_NEG_BIG = -1e30               # finite "minus infinity" for key-padding bias
_LN_EPS = 1e-5                 # matches nn.LayerNorm default


def _pick_tile_m(m):
    """Largest row-tile (<=512) that divides M; keeps blocks well under 32 MiB scoped VMEM."""
    for t in (512, 256, 128, 64, 32, 16, 8):
        if m % t == 0:
            return t
    return m


# ----------------------------- Pallas kernels -----------------------------

def _linear_kernel(x_ref, w_ref, b_ref, o_ref):
    x = x_ref[...].astype(_MXU_DTYPE)
    y = jnp.dot(x, w_ref[...], preferred_element_type=jnp.float32) + b_ref[...]
    o_ref[...] = y.astype(o_ref.dtype)


def linear(x2d, w, b):
    """y = x @ W + b, tiled over the row (batch*seq) axis."""
    M, K = x2d.shape
    N = w.shape[1]
    tm = _pick_tile_m(M)
    return pl.pallas_call(
        _linear_kernel,
        out_shape=jax.ShapeDtypeStruct((M, N), x2d.dtype),
        grid=(M // tm,),
        in_specs=[pl.BlockSpec((tm, K), lambda i: (i, 0)),
                  pl.BlockSpec((K, N), lambda i: (0, 0)),
                  pl.BlockSpec((1, N), lambda i: (0, 0))],
        out_specs=pl.BlockSpec((tm, N), lambda i: (i, 0)),
        compiler_params=pltpu.CompilerParams(dimension_semantics=("parallel",)),
    )(x2d, w.astype(_MXU_DTYPE), b.reshape(1, N))


def _layernorm_f32(z, gamma, beta):
    mean = jnp.mean(z, axis=-1, keepdims=True)
    var = jnp.mean((z - mean) ** 2, axis=-1, keepdims=True)
    return (z - mean) * jax.lax.rsqrt(var + _LN_EPS) * gamma + beta


def _proj_add_ln_kernel(attn_ref, res_ref, w_ref, b_ref, g_ref, beta_ref, o_ref):
    # out-projection + residual add + LayerNorm1, fused.
    a = attn_ref[...].astype(_MXU_DTYPE)
    y = jnp.dot(a, w_ref[...], preferred_element_type=jnp.float32) + b_ref[...]
    z = res_ref[...].astype(jnp.float32) + y
    o_ref[...] = _layernorm_f32(z, g_ref[...], beta_ref[...]).astype(o_ref.dtype)


def proj_add_ln(attn2d, res2d, w, b, gamma, beta):
    M, E = attn2d.shape
    tm = _pick_tile_m(M)
    return pl.pallas_call(
        _proj_add_ln_kernel,
        out_shape=jax.ShapeDtypeStruct((M, E), attn2d.dtype),
        grid=(M // tm,),
        in_specs=[pl.BlockSpec((tm, E), lambda i: (i, 0)),
                  pl.BlockSpec((tm, E), lambda i: (i, 0)),
                  pl.BlockSpec((E, E), lambda i: (0, 0)),
                  pl.BlockSpec((1, E), lambda i: (0, 0)),
                  pl.BlockSpec((1, E), lambda i: (0, 0)),
                  pl.BlockSpec((1, E), lambda i: (0, 0))],
        out_specs=pl.BlockSpec((tm, E), lambda i: (i, 0)),
        compiler_params=pltpu.CompilerParams(dimension_semantics=("parallel",)),
    )(attn2d, res2d, w.astype(_MXU_DTYPE), b.reshape(1, E),
      gamma.reshape(1, E), beta.reshape(1, E))


def _ffn_add_ln_kernel(x_ref, w1_ref, b1_ref, w2_ref, b2_ref, g_ref, beta_ref, o_ref):
    # linear1 -> ReLU -> linear2 -> residual add -> LayerNorm2, fused.
    # (PyTorch default activation='relu', dropout=0)
    x = x_ref[...]
    h = jnp.dot(x.astype(_MXU_DTYPE), w1_ref[...],
                preferred_element_type=jnp.float32) + b1_ref[...]
    h = jnp.maximum(h, 0.0)
    y = jnp.dot(h.astype(_MXU_DTYPE), w2_ref[...],
                preferred_element_type=jnp.float32) + b2_ref[...]
    z = x.astype(jnp.float32) + y
    o_ref[...] = _layernorm_f32(z, g_ref[...], beta_ref[...]).astype(o_ref.dtype)


def ffn_add_ln(x2d, w1, b1, w2, b2, gamma, beta):
    M, E = x2d.shape
    H = w1.shape[1]
    tm = _pick_tile_m(M)
    return pl.pallas_call(
        _ffn_add_ln_kernel,
        out_shape=jax.ShapeDtypeStruct((M, E), x2d.dtype),
        grid=(M // tm,),
        in_specs=[pl.BlockSpec((tm, E), lambda i: (i, 0)),
                  pl.BlockSpec((E, H), lambda i: (0, 0)),
                  pl.BlockSpec((1, H), lambda i: (0, 0)),
                  pl.BlockSpec((H, E), lambda i: (0, 0)),
                  pl.BlockSpec((1, E), lambda i: (0, 0)),
                  pl.BlockSpec((1, E), lambda i: (0, 0)),
                  pl.BlockSpec((1, E), lambda i: (0, 0))],
        out_specs=pl.BlockSpec((tm, E), lambda i: (i, 0)),
        compiler_params=pltpu.CompilerParams(dimension_semantics=("parallel",)),
    )(x2d, w1.astype(_MXU_DTYPE), b1.reshape(1, H),
      w2.astype(_MXU_DTYPE), b2.reshape(1, E),
      gamma.reshape(1, E), beta.reshape(1, E))


def _mha_kernel(qkv_ref, bias_ref, o_ref, *, num_heads, head_dim, scale):
    # One batch element per grid step.  Heads are lane slices of the fused [S, 3E] tile;
    # the output is written once as a lane-dense [S, E] block.
    qkv = qkv_ref[0]                     # (S, 3E) f32
    bias = bias_ref[0]                   # (1, S) additive key-padding bias (finite)
    E = num_heads * head_dim
    head_outs = []
    for h in range(num_heads):           # static unrolled loop over heads
        lo = h * head_dim
        q = (qkv[:, lo:lo + head_dim] * scale).astype(_MXU_DTYPE)       # scale folded into q
        k = qkv[:, E + lo:E + lo + head_dim].astype(_MXU_DTYPE)
        v = qkv[:, 2 * E + lo:2 * E + lo + head_dim].astype(_MXU_DTYPE)
        s = jnp.dot(q, k.T, preferred_element_type=jnp.float32) + bias  # (S, S) f32
        s = s - jnp.max(s, axis=-1, keepdims=True)
        p = jnp.exp(s)
        p = p * pl.reciprocal(jnp.sum(p, axis=-1, keepdims=True), approx=True)
        head_outs.append(jnp.dot(p.astype(_MXU_DTYPE), v,
                                 preferred_element_type=jnp.float32))
    o_ref[0] = jnp.concatenate(head_outs, axis=-1).astype(o_ref.dtype)


def mha_core(qkv, key_bias, num_heads, head_dim, scale):
    """qkv: (B, S, 3E) fused projections; key_bias: (B, 1, S) additive mask."""
    # TODO(synk): for long sequences, add a KV grid axis with flash-style online softmax
    # so the full [S, S] score matrix is never materialized (v7x 64 MiB VMEM budget).
    B, S, threeE = qkv.shape
    E = num_heads * head_dim
    return pl.pallas_call(
        functools.partial(_mha_kernel, num_heads=num_heads,
                          head_dim=head_dim, scale=scale),
        out_shape=jax.ShapeDtypeStruct((B, S, E), qkv.dtype),
        grid=(B,),
        in_specs=[pl.BlockSpec((1, S, threeE), lambda b: (b, 0, 0)),
                  pl.BlockSpec((1, 1, S), lambda b: (b, 0, 0))],
        out_specs=pl.BlockSpec((1, S, E), lambda b: (b, 0, 0)),
        compiler_params=pltpu.CompilerParams(dimension_semantics=("parallel",)),
    )(qkv, key_bias)


# ----------------------------- model glue -----------------------------

def encoder_layer(x2, mask_bias, p, num_heads, B, S, E):
    """One nn.TransformerEncoderLayer (batch_first, norm_first=False, ReLU, dropout=0)."""
    Dh = E // num_heads

    # --- self attention (fused QKV projection, heads handled inside the kernel) ---
    qkv = linear(x2, p["wqkv"], p["bqkv"])                       # (B*S, 3E)
    attn = mha_core(qkv.reshape(B, S, 3 * E), mask_bias,
                    num_heads, Dh, 1.0 / (Dh ** 0.5))            # (B, S, E)
    # out-projection + residual + LayerNorm1 fused
    x2 = proj_add_ln(attn.reshape(B * S, E), x2,
                     p["wo"], p["bo"], p["ln1_g"], p["ln1_b"])

    # --- feed forward + residual + LayerNorm2 fused ---
    x2 = ffn_add_ln(x2, p["w1"], p["b1"], p["w2"], p["b2"],
                    p["ln2_g"], p["ln2_b"])
    return x2


def transformer_classifier(x, params, num_heads):
    B, S, F = x.shape
    E = params["embed_w"].shape[1]

    h2 = linear(x.reshape(B * S, F), params["embed_w"], params["embed_b"])   # (B*S, E)

    # padding_mask = x.sum(dim=-1) == 0, computed on the *embedded* activations —
    # this matches the PyTorch forward exactly (mask is computed after self.embedding).
    padding_mask = jnp.sum(h2.reshape(B, S, E), axis=-1) == 0.0              # (B, S)
    mask_bias = jnp.where(padding_mask, _NEG_BIG, 0.0).astype(jnp.float32).reshape(B, 1, S)

    for layer_p in params["layers"]:
        h2 = encoder_layer(h2, mask_bias, layer_p, num_heads, B, S, E)

    logits = linear(h2, params["cls_w"], params["cls_b"])
    return logits.reshape(B, S, params["cls_w"].shape[1])


def init_params(key, in_dim, num_classes, embed_dim, num_layers):
    """Deterministic synthetic init matching PyTorch parameter shapes.

    Linear weights are stored pre-transposed as [in, out]; the Q/K/V projection is stored
    fused as a single [E, 3E] weight (same as nn.MultiheadAttention's in_proj, transposed).
    """
    def lin(k, fan_in, fan_out):
        k1, k2 = jax.random.split(k)
        bound = 1.0 / (fan_in ** 0.5)
        w = jax.random.uniform(k1, (fan_in, fan_out), jnp.float32, -bound, bound)
        b = jax.random.uniform(k2, (fan_out,), jnp.float32, -bound, bound)
        return w, b

    keys = jax.random.split(key, 2 + num_layers)
    params = {}
    params["embed_w"], params["embed_b"] = lin(keys[0], in_dim, embed_dim)
    params["cls_w"], params["cls_b"] = lin(keys[1], embed_dim, num_classes)

    layers = []
    for li in range(num_layers):
        lk = jax.random.split(keys[2 + li], 4)
        p = {}
        p["wqkv"], p["bqkv"] = lin(lk[0], embed_dim, 3 * embed_dim)   # fused Q|K|V
        p["wo"], p["bo"] = lin(lk[1], embed_dim, embed_dim)
        p["w1"], p["b1"] = lin(lk[2], embed_dim, 2 * embed_dim)       # dim_feedforward = 2*embed
        p["w2"], p["b2"] = lin(lk[3], 2 * embed_dim, embed_dim)
        p["ln1_g"] = jnp.ones((embed_dim,), jnp.float32)
        p["ln1_b"] = jnp.zeros((embed_dim,), jnp.float32)
        p["ln2_g"] = jnp.ones((embed_dim,), jnp.float32)
        p["ln2_b"] = jnp.zeros((embed_dim,), jnp.float32)
        layers.append(p)
    params["layers"] = layers
    return params


if __name__ == "__main__":
    # small shapes: batch=2, seq=8, inputfeature_dim=16, embed_dim=32, heads=4, layers=2, classes=5
    B, S = 2, 8
    in_dim, num_classes, num_heads, embed_dim, num_layers = 16, 5, 4, 32, 2

    key = jax.random.PRNGKey(0)
    kx, kp = jax.random.split(key)
    x = jax.random.normal(kx, (B, S, in_dim), dtype=jnp.float32)
    params = init_params(kp, in_dim, num_classes, embed_dim, num_layers)

    fwd = jax.jit(functools.partial(transformer_classifier, num_heads=num_heads))
    out = fwd(x, params)
    jax.block_until_ready(out)

    assert out.shape == (B, S, num_classes)
    assert bool(jnp.all(jnp.isfinite(out)))
    print("KERNEL_OK")
</pallas_src>

<mosaic_0001>
module attributes {stable_mosaic.version = 11 : i64} {
  func.func @_linear_kernel(%arg0: i32, %arg1: memref<16x16xf32, #tpu.memory_space<vmem>>, %arg2: memref<16x32xbf16, #tpu.memory_space<vmem>>, %arg3: memref<1x32xf32, #tpu.memory_space<vmem>>, %arg4: memref<16x32xf32, #tpu.memory_space<vmem>>) attributes {dimension_semantics = [#tpu.dimension_semantics<parallel>], iteration_bounds = array<i64: 1>, scalar_prefetch = 0 : i64, scratch_operands = 0 : i64, tpu.core_type = #tpu.core_type<tc>, window_params = [{transform_indices = @transform_0, window_bounds = array<i64: 16, 16>}, {pipeline_mode = #tpu.pipeline_mode<synchronous>, transform_indices = @transform_1, window_bounds = array<i64: 16, 32>}, {pipeline_mode = #tpu.pipeline_mode<synchronous>, transform_indices = @transform_2, window_bounds = array<i64: 1, 32>}, {transform_indices = @transform_3, window_bounds = array<i64: 16, 32>}]} {
    %c0 = arith.constant 0 : index
    %c0_0 = arith.constant 0 : index
    %0 = vector.load %arg1[%c0, %c0_0] : memref<16x16xf32, #tpu.memory_space<vmem>>, vector<16x16xf32>
    %1 = arith.truncf %0 : vector<16x16xf32> to vector<16x16xbf16>
    %c0_1 = arith.constant 0 : index
    %c0_2 = arith.constant 0 : index
    %2 = vector.load %arg2[%c0_1, %c0_2] : memref<16x32xbf16, #tpu.memory_space<vmem>>, vector<16x32xbf16>
    %cst = arith.constant dense<0.000000e+00> : vector<16x32xf32>
    %3 = tpu.matmul %1, %2, %cst {dimension_numbers = #tpu.dot_dimension_numbers<[1], [0], [0], [1], [0, 0, 1, 1], [], []>} : vector<16x16xbf16>, vector<16x32xbf16>, vector<16x32xf32> -> vector<16x32xf32>
    %c0_3 = arith.constant 0 : index
    %c0_4 = arith.constant 0 : index
    %4 = vector.load %arg3[%c0_3, %c0_4] : memref<1x32xf32, #tpu.memory_space<vmem>>, vector<1x32xf32>
    %5 = vector.broadcast %4 : vector<1x32xf32> to vector<16x32xf32>
    %6 = arith.addf %3, %5 : vector<16x32xf32>
    %c0_5 = arith.constant 0 : index
    %c0_6 = arith.constant 0 : index
    %7 = vector.load %arg4[%c0_5, %c0_6] : memref<16x32xf32, #tpu.memory_space<vmem>>, vector<16x32xf32>
    tpu.vector_store %arg4[%c0_5, %c0_6], %6 {strides = array<i32>} : memref<16x32xf32, #tpu.memory_space<vmem>>, vector<16x32xf32>,
    return
  }
  func.func @transform_0(%arg0: i32) -> (i32, i32) {
    %c0_i32 = arith.constant 0 : i32
    %c0_i32_0 = arith.constant 0 : i32
    return %arg0, %c0_i32 : i32, i32
  }
  func.func @transform_1(%arg0: i32) -> (i32, i32) {
    %c0_i32 = arith.constant 0 : i32
    %c0_i32_0 = arith.constant 0 : i32
    %c0_i32_1 = arith.constant 0 : i32
    return %c0_i32, %c0_i32_0 : i32, i32
  }
  func.func @transform_2(%arg0: i32) -> (i32, i32) {
    %c0_i32 = arith.constant 0 : i32
    %c0_i32_0 = arith.constant 0 : i32
    %c0_i32_1 = arith.constant 0 : i32
    return %c0_i32, %c0_i32_0 : i32, i32
  }
  func.func @transform_3(%arg0: i32) -> (i32, i32) {
    %c0_i32 = arith.constant 0 : i32
    %c0_i32_0 = arith.constant 0 : i32
    return %arg0, %c0_i32 : i32, i32
  }
}

module attributes {stable_mosaic.version = 11 : i64} {
  func.func @_linear_kernel(%arg0: i32, %arg1: memref<16x32xf32, #tpu.memory_space<vmem>>, %arg2: memref<32x96xbf16, #tpu.memory_space<vmem>>, %arg3: memref<1x96xf32, #tpu.memory_space<vmem>>, %arg4: memref<16x96xf32, #tpu.memory_space<vmem>>) attributes {dimension_semantics = [#tpu.dimension_semantics<parallel>], iteration_bounds = array<i64: 1>, scalar_prefetch = 0 : i64, scratch_operands = 0 : i64, tpu.core_type = #tpu.core_type<tc>, window_params = [{transform_indices = @transform_0, window_bounds = array<i64: 16, 32>}, {pipeline_mode = #tpu.pipeline_mode<synchronous>, transform_indices = @transform_1, window_bounds = array<i64: 32, 96>}, {pipeline_mode = #tpu.pipeline_mode<synchronous>, transform_indices = @transform_2, window_bounds = array<i64: 1, 96>}, {transform_indices = @transform_3, window_bounds = array<i64: 16, 96>}]} {
    %c0 = arith.constant 0 : index
    %c0_0 = arith.constant 0 : index
    %0 = vector.load %arg1[%c0, %c0_0] : memref<16x32xf32, #tpu.memory_space<vmem>>, vector<16x32xf32>
    %1 = arith.truncf %0 : vector<16x32xf32> to vector<16x32xbf16>
    %c0_1 = arith.constant 0 : index
    %c0_2 = arith.constant 0 : index
    %2 = vector.load %arg2[%c0_1, %c0_2] : memref<32x96xbf16, #tpu.memory_space<vmem>>, vector<32x96xbf16>
    %cst = arith.constant dense<0.000000e+00> : vector<16x96xf32>
    %3 = tpu.matmul %1, %2, %cst {dimension_numbers = #tpu.dot_dimension_numbers<[1], [0], [0], [1], [0, 0, 1, 1], [], []>} : vector<16x32xbf16>, vector<32x96xbf16>, vector<16x96xf32> -> vector<16x96xf32>
    %c0_3 = arith.constant 0 : index
    %c0_4 = arith.constant 0 : index
    %4 = vector.load %arg3[%c0_3, %c0_4] : memref<1x96xf32, #tpu.memory_space<vmem>>, vector<1x96xf32>
    %5 = vector.broadcast %4 : vector<1x96xf32> to vector<16x96xf32>
    %6 = arith.addf %3, %5 : vector<16x96xf32>
    %c0_5 = arith.constant 0 : index
    %c0_6 = arith.constant 0 : index
    %7 = vector.load %arg4[%c0_5, %c0_6] : memref<16x96xf32, #tpu.memory_space<vmem>>, vector<16x96xf32>
    tpu.vector_store %arg4[%c0_5, %c0_6], %6 {strides = array<i32>} : memref<16x96xf32, #tpu.memory_space<vmem>>, vector<16x96xf32>,
    return
  }
  func.func @transform_0(%arg0: i32) -> (i32, i32) {
    %c0_i32 = arith.constant 0 : i32
    %c0_i32_0 = arith.constant 0 : i32
    return %arg0, %c0_i32 : i32, i32
  }
  func.func @transform_1(%arg0: i32) -> (i32, i32) {
    %c0_i32 = arith.constant 0 : i32
    %c0_i32_0 = arith.constant 0 : i32
    %c0_i32_1 = arith.constant 0 : i32
    return %c0_i32, %c0_i32_0 : i32, i32
  }
  func.func @transform_2(%arg0: i32) -> (i32, i32) {
    %c0_i32 = arith.constant 0 : i32
    %c0_i32_0 = arith.constant 0 : i32
    %c0_i32_1 = arith.constant 0 : i32
    return %c0_i32, %c0_i32_0 : i32, i32
  }
  func.func @transform_3(%arg0: i32) -> (i32, i32) {
    %c0_i32 = arith.constant 0 : i32
    %c0_i32_0 = arith.constant 0 : i32
    return %arg0, %c0_i32 : i32, i32
  }
}

module attributes {stable_mosaic.version = 11 : i64} {
  func.func @_mha_kernel(%arg0: i32, %arg1: memref<1x8x96xf32, #tpu.memory_space<vmem>>, %arg2: memref<1x1x8xf32, #tpu.memory_space<vmem>>, %arg3: memref<1x8x32xf32, #tpu.memory_space<vmem>>) attributes {dimension_semantics = [#tpu.dimension_semantics<parallel>], iteration_bounds = array<i64: 2>, scalar_prefetch = 0 : i64, scratch_operands = 0 : i64, tpu.core_type = #tpu.core_type<tc>, window_params = [{transform_indices = @transform_0, window_bounds = array<i64: 1, 8, 96>}, {transform_indices = @transform_1, window_bounds = array<i64: 1, 1, 8>}, {transform_indices = @transform_2, window_bounds = array<i64: 1, 8, 32>}]} {
    %c0 = arith.constant 0 : index
    %c0_0 = arith.constant 0 : index
    %c0_1 = arith.constant 0 : index
    %0 = vector.load %arg1[%c0, %c0_0, %c0_1] : memref<1x8x96xf32, #tpu.memory_space<vmem>>, vector<1x8x96xf32>
    %1 = vector.shape_cast %0 : vector<1x8x96xf32> to vector<8x96xf32>
    %c0_2 = arith.constant 0 : index
    %c0_3 = arith.constant 0 : index
    %c0_4 = arith.constant 0 : index
    %2 = vector.load %arg2[%c0_2, %c0_3, %c0_4] : memref<1x1x8xf32, #tpu.memory_space<vmem>>, vector<1x1x8xf32>
    %3 = vector.shape_cast %2 : vector<1x1x8xf32> to vector<1x8xf32>
    %4 = vector.extract_strided_slice %1 {offsets = [0, 0], sizes = [8, 8], strides = [1, 1]} : vector<8x96xf32> to vector<8x8xf32>
    %cst = arith.constant 0.353553385 : f32
    %5 = vector.broadcast %cst : f32 to vector<8x8xf32>
    %6 = arith.mulf %4, %5 : vector<8x8xf32>
    %7 = arith.truncf %6 : vector<8x8xf32> to vector<8x8xbf16>
    %8 = vector.extract_strided_slice %1 {offsets = [0, 32], sizes = [8, 8], strides = [1, 1]} : vector<8x96xf32> to vector<8x8xf32>
    %9 = arith.truncf %8 : vector<8x8xf32> to vector<8x8xbf16>
    %10 = vector.extract_strided_slice %1 {offsets = [0, 64], sizes = [8, 8], strides = [1, 1]} : vector<8x96xf32> to vector<8x8xf32>
    %11 = arith.truncf %10 : vector<8x8xf32> to vector<8x8xbf16>
    %12 = tpu.transpose %9, [1, 0] : vector<8x8xbf16> -> vector<8x8xbf16>
    %cst_5 = arith.constant dense<0.000000e+00> : vector<8x8xf32>
    %13 = tpu.matmul %7, %12, %cst_5 {dimension_numbers = #tpu.dot_dimension_numbers<[1], [0], [0], [1], [0, 0, 1, 1], [], []>} : vector<8x8xbf16>, vector<8x8xbf16>, vector<8x8xf32> -> vector<8x8xf32>
    %14 = vector.broadcast %3 : vector<1x8xf32> to vector<8x8xf32>
    %15 = arith.addf %13, %14 : vector<8x8xf32>
    %cst_6 = arith.constant dense<0xFF800000> : vector<8xf32>
    %16 = vector.multi_reduction <maximumf>, %15, %cst_6 [1] : vector<8x8xf32> to vector<8xf32>
    %17 = vector.shape_cast %16 : vector<8xf32> to vector<8x1xf32>
    %18 = vector.broadcast %17 : vector<8x1xf32> to vector<8x8xf32>
    %19 = arith.subf %15, %18 : vector<8x8xf32>
    %20 = math.exp %19 : vector<8x8xf32>
    %cst_7 = arith.constant dense<0.000000e+00> : vector<8xf32>
    %21 = vector.multi_reduction <add>, %20, %cst_7 [1] : vector<8x8xf32> to vector<8xf32>
    %22 = vector.shape_cast %21 : vector<8xf32> to vector<8x1xf32>
    %23 = tpu.reciprocal %22 {approx = true} : vector<8x1xf32> -> vector<8x1xf32>
    %24 = vector.broadcast %23 : vector<8x1xf32> to vector<8x8xf32>
    %25 = arith.mulf %20, %24 : vector<8x8xf32>
    %26 = arith.truncf %25 : vector<8x8xf32> to vector<8x8xbf16>
    %cst_8 = arith.constant dense<0.000000e+00> : vector<8x8xf32>
    %27 = tpu.matmul %26, %11, %cst_8 {dimension_numbers = #tpu.dot_dimension_numbers<[1], [0], [0], [1], [0, 0, 1, 1], [], []>} : vector<8x8xbf16>, vector<8x8xbf16>, vector<8x8xf32> -> vector<8x8xf32>
    %28 = vector.extract_strided_slice %1 {offsets = [0, 8], sizes = [8, 8], strides = [1, 1]} : vector<8x96xf32> to vector<8x8xf32>
    %cst_9 = arith.constant 0.353553385 : f32
    %29 = vector.broadcast %cst_9 : f32 to vector<8x8xf32>
    %30 = arith.mulf %28, %29 : vector<8x8xf32>
    %31 = arith.truncf %30 : vector<8x8xf32> to vector<8x8xbf16>
    %32 = vector.extract_strided_slice %1 {offsets = [0, 40], sizes = [8, 8], strides = [1, 1]} : vector<8x96xf32> to vector<8x8xf32>
    %33 = arith.truncf %32 : vector<8x8xf32> to vector<8x8xbf16>
    %34 = vector.extract_strided_slice %1 {offsets = [0, 72], sizes = [8, 8], strides = [1, 1]} : vector<8x96xf32> to vector<8x8xf32>
    %35 = arith.truncf %34 : vector<8x8xf32> to vector<8x8xbf16>
    %36 = tpu.transpose %33, [1, 0] : vector<8x8xbf16> -> vector<8x8xbf16>
    %cst_10 = arith.constant dense<0.000000e+00> : vector<8x8xf32>
    %37 = tpu.matmul %31, %36, %cst_10 {dimension_numbers = #tpu.dot_dimension_numbers<[1], [0], [0], [1], [0, 0, 1, 1], [], []>} : vector<8x8xbf16>, vector<8x8xbf16>, vector<8x8xf32> -> vector<8x8xf32>
    %38 = vector.broadcast %3 : vector<1x8xf32> to vector<8x8xf32>
    %39 = arith.addf %37, %38 : vector<8x8xf32>
    %cst_11 = arith.constant dense<0xFF800000> : vector<8xf32>
    %40 = vector.multi_reduction <maximumf>, %39, %cst_11 [1] : vector<8x8xf32> to vector<8xf32>
    %41 = vector.shape_cast %40 : vector<8xf32> to vector<8x1xf32>
    %42 = vector.broadcast %41 : vector<8x1xf32> to vector<8x8xf32>
    %43 = arith.subf %39, %42 : vector<8x8xf32>
    %44 = math.exp %43 : vector<8x8xf32>
    %cst_12 = arith.constant dense<0.000000e+00> : vector<8xf32>
    %45 = vector.multi_reduction <add>, %44, %cst_12 [1] : vector<8x8xf32> to vector<8xf32>
    %46 = vector.shape_cast %45 : vector<8xf32> to vector<8x1xf32>
    %47 = tpu.reciprocal %46 {approx = true} : vector<8x1xf32> -> vector<8x1xf32>
    %48 = vector.broadcast %47 : vector<8x1xf32> to vector<8x8xf32>
    %49 = arith.mulf %44, %48 : vector<8x8xf32>
    %50 = arith.truncf %49 : vector<8x8xf32> to vector<8x8xbf16>
    %cst_13 = arith.constant dense<0.000000e+00> : vector<8x8xf32>
    %51 = tpu.matmul %50, %35, %cst_13 {dimension_numbers = #tpu.dot_dimension_numbers<[1], [0], [0], [1], [0, 0, 1, 1], [], []>} : vector<8x8xbf16>, vector<8x8xbf16>, vector<8x8xf32> -> vector<8x8xf32>
    %52 = vector.extract_strided_slice %1 {offsets = [0, 16], sizes = [8, 8], strides = [1, 1]} : vector<8x96xf32> to vector<8x8xf32>
    %cst_14 = arith.constant 0.353553385 : f32
    %53 = vector.broadcast %cst_14 : f32 to vector<8x8xf32>
    %54 = arith.mulf %52, %53 : vector<8x8xf32>
    %55 = arith.truncf %54 : vector<8x8xf32> to vector<8x8xbf16>
    %56 = vector.extract_strided_slice %1 {offsets = [0, 48], sizes = [8, 8], strides = [1, 1]} : vector<8x96xf32> to vector<8x8xf32>
    %57 = arith.truncf %56 : vector<8x8xf32> to vector<8x8xbf16>
    %58 = vector.extract_strided_slice %1 {offsets = [0, 80], sizes = [8, 8], strides = [1, 1]} : vector<8x96xf32> to vector<8x8xf32>
    %59 = arith.truncf %58 : vector<8x8xf32> to vector<8x8xbf16>
    %60 = tpu.transpose %57, [1, 0] : vector<8x8xbf16> -> vector<8x8xbf16>
    %cst_15 = arith.constant dense<0.000000e+00> : vector<8x8xf32>
    %61 = tpu.matmul %55, %60, %cst_15 {dimension_numbers = #tpu.dot_dimension_numbers<[1], [0], [0], [1], [0, 0, 1, 1], [], []>} : vector<8x8xbf16>, vector<8x8xbf16>, vector<8x8xf32> -> vector<8x8xf32>
    %62 = vector.broadcast %3 : vector<1x8xf32> to vector<8x8xf32>
    %63 = arith.addf %61, %62 : vector<8x8xf32>
    %cst_16 = arith.constant dense<0xFF800000> : vector<8xf32>
    %64 = vector.multi_reduction <maximumf>, %63, %cst_16 [1] : vector<8x8xf32> to vector<8xf32>
    %65 = vector.shape_cast %64 : vector<8xf32> to vector<8x1xf32>
    %66 = vector.broadcast %65 : vector<8x1xf32> to vector<8x8xf32>
    %67 = arith.subf %63, %66 : vector<8x8xf32>
    %68 = math.exp %67 : vector<8x8xf32>
    %cst_17 = arith.constant dense<0.000000e+00> : vector<8xf32>
    %69 = vector.multi_reduction <add>, %68, %cst_17 [1] : vector<8x8xf32> to vector<8xf32>
    %70 = vector.shape_cast %69 : vector<8xf32> to vector<8x1xf32>
    %71 = tpu.reciprocal %70 {approx = true} : vector<8x1xf32> -> vector<8x1xf32>
    %72 = vector.broadcast %71 : vector<8x1xf32> to vector<8x8xf32>
    %73 = arith.mulf %68, %72 : vector<8x8xf32>
    %74 = arith.truncf %73 : vector<8x8xf32> to vector<8x8xbf16>
    %cst_18 = arith.constant dense<0.000000e+00> : vector<8x8xf32>
    %75 = tpu.matmul %74, %59, %cst_18 {dimension_numbers = #tpu.dot_dimension_numbers<[1], [0], [0], [1], [0, 0, 1, 1], [], []>} : vector<8x8xbf16>, vector<8x8xbf16>, vector<8x8xf32> -> vector<8x8xf32>
    %76 = vector.extract_strided_slice %1 {offsets = [0, 24], sizes = [8, 8], strides = [1, 1]} : vector<8x96xf32> to vector<8x8xf32>
    %cst_19 = arith.constant 0.353553385 : f32
    %77 = vector.broadcast %cst_19 : f32 to vector<8x8xf32>
    %78 = arith.mulf %76, %77 : vector<8x8xf32>
    %79 = arith.truncf %78 : vector<8x8xf32> to vector<8x8xbf16>
    %80 = vector.extract_strided_slice %1 {offsets = [0, 56], sizes = [8, 8], strides = [1, 1]} : vector<8x96xf32> to vector<8x8xf32>
    %81 = arith.truncf %80 : vector<8x8xf32> to vector<8x8xbf16>
    %82 = vector.extract_strided_slice %1 {offsets = [0, 88], sizes = [8, 8], strides = [1, 1]} : vector<8x96xf32> to vector<8x8xf32>
    %83 = arith.truncf %82 : vector<8x8xf32> to vector<8x8xbf16>
    %84 = tpu.transpose %81, [1, 0] : vector<8x8xbf16> -> vector<8x8xbf16>
    %cst_20 = arith.constant dense<0.000000e+00> : vector<8x8xf32>
    %85 = tpu.matmul %79, %84, %cst_20 {dimension_numbers = #tpu.dot_dimension_numbers<[1], [0], [0], [1], [0, 0, 1, 1], [], []>} : vector<8x8xbf16>, vector<8x8xbf16>, vector<8x8xf32> -> vector<8x8xf32>
    %86 = vector.broadcast %3 : vector<1x8xf32> to vector<8x8xf32>
    %87 = arith.addf %85, %86 : vector<8x8xf32>
    %cst_21 = arith.constant dense<0xFF800000> : vector<8xf32>
    %88 = vector.multi_reduction <maximumf>, %87, %cst_21 [1] : vector<8x8xf32> to vector<8xf32>
    %89 = vector.shape_cast %88 : vector<8xf32> to vector<8x1xf32>
    %90 = vector.broadcast %89 : vector<8x1xf32> to vector<8x8xf32>
    %91 = arith.subf %87, %90 : vector<8x8xf32>
    %92 = math.exp %91 : vector<8x8xf32>
    %cst_22 = arith.constant dense<0.000000e+00> : vector<8xf32>
    %93 = vector.multi_reduction <add>, %92, %cst_22 [1] : vector<8x8xf32> to vector<8xf32>
    %94 = vector.shape_cast %93 : vector<8xf32> to vector<8x1xf32>
    %95 = tpu.reciprocal %94 {approx = true} : vector<8x1xf32> -> vector<8x1xf32>
    %96 = vector.broadcast %95 : vector<8x1xf32> to vector<8x8xf32>
    %97 = arith.mulf %92, %96 : vector<8x8xf32>
    %98 = arith.truncf %97 : vector<8x8xf32> to vector<8x8xbf16>
    %cst_23 = arith.constant dense<0.000000e+00> : vector<8x8xf32>
    %99 = tpu.matmul %98, %83, %cst_23 {dimension_numbers = #tpu.dot_dimension_numbers<[1], [0], [0], [1], [0, 0, 1, 1], [], []>} : vector<8x8xbf16>, vector<8x8xbf16>, vector<8x8xf32> -> vector<8x8xf32>
    %100 = tpu.concatenate %27, %51, %75, %99 in 1 : vector<8x8xf32>, vector<8x8xf32>, vector<8x8xf32>, vector<8x8xf32> -> vector<8x32xf32>
    %c0_24 = arith.constant 0 : index
    %c0_25 = arith.constant 0 : index
    %c0_26 = arith.constant 0 : index
    %101 = vector.load %arg3[%c0_24, %c0_25, %c0_26] : memref<1x8x32xf32, #tpu.memory_space<vmem>>, vector<1x8x32xf32>
    %102 = vector.shape_cast %101 : vector<1x8x32xf32> to vector<8x32xf32>
    %103 = vector.shape_cast %100 : vector<8x32xf32> to vector<1x8x32xf32>
    tpu.vector_store %arg3[%c0_24, %c0_25, %c0_26], %103 {strides = array<i32>} : memref<1x8x32xf32, #tpu.memory_space<vmem>>, vector<1x8x32xf32>,
    return
  }
  func.func @transform_0(%arg0: i32) -> (i32, i32, i32) {
    %c0_i32 = arith.constant 0 : i32
    %c0_i32_0 = arith.constant 0 : i32
    %c0_i32_1 = arith.constant 0 : i32
    return %arg0, %c0_i32, %c0_i32_0 : i32, i32, i32
  }
  func.func @transform_1(%arg0: i32) -> (i32, i32, i32) {
    %c0_i32 = arith.constant 0 : i32
    %c0_i32_0 = arith.constant 0 : i32
    %c0_i32_1 = arith.constant 0 : i32
    return %arg0, %c0_i32, %c0_i32_0 : i32, i32, i32
  }
  func.func @transform_2(%arg0: i32) -> (i32, i32, i32) {
    %c0_i32 = arith.constant 0 : i32
    %c0_i32_0 = arith.constant 0 : i32
    %c0_i32_1 = arith.constant 0 : i32
    return %arg0, %c0_i32, %c0_i32_0 : i32, i32, i32
  }
}

module attributes {stable_mosaic.version = 11 : i64} {
  func.func @_proj_add_ln_kernel(%arg0: i32, %arg1: memref<16x32xf32, #tpu.memory_space<vmem>>, %arg2: memref<16x32xf32, #tpu.memory_space<vmem>>, %arg3: memref<32x32xbf16, #tpu.memory_space<vmem>>, %arg4: memref<1x32xf32, #tpu.memory_space<vmem>>, %arg5: memref<1x32xf32, #tpu.memory_space<vmem>>, %arg6: memref<1x32xf32, #tpu.memory_space<vmem>>, %arg7: memref<16x32xf32, #tpu.memory_space<vmem>>) attributes {dimension_semantics = [#tpu.dimension_semantics<parallel>], iteration_bounds = array<i64: 1>, scalar_prefetch = 0 : i64, scratch_operands = 0 : i64, tpu.core_type = #tpu.core_type<tc>, window_params = [{transform_indices = @transform_0, window_bounds = array<i64: 16, 32>}, {transform_indices = @transform_1, window_bounds = array<i64: 16, 32>}, {pipeline_mode = #tpu.pipeline_mode<synchronous>, transform_indices = @transform_2, window_bounds = array<i64: 32, 32>}, {pipeline_mode = #tpu.pipeline_mode<synchronous>, transform_indices = @transform_3, window_bounds = array<i64: 1, 32>}, {pipeline_mode = #tpu.pipeline_mode<synchronous>, transform_indices = @transform_4, window_bounds = array<i64: 1, 32>}, {pipeline_mode = #tpu.pipeline_mode<synchronous>, transform_indices = @transform_5, window_bounds = array<i64: 1, 32>}, {transform_indices = @transform_6, window_bounds = array<i64: 16, 32>}]} {
    %c0 = arith.constant 0 : index
    %c0_0 = arith.constant 0 : index
    %0 = vector.load %arg1[%c0, %c0_0] : memref<16x32xf32, #tpu.memory_space<vmem>>, vector<16x32xf32>
    %1 = arith.truncf %0 : vector<16x32xf32> to vector<16x32xbf16>
    %c0_1 = arith.constant 0 : index
    %c0_2 = arith.constant 0 : index
    %2 = vector.load %arg3[%c0_1, %c0_2] : memref<32x32xbf16, #tpu.memory_space<vmem>>, vector<32x32xbf16>
    %cst = arith.constant dense<0.000000e+00> : vector<16x32xf32>
    %3 = tpu.matmul %1, %2, %cst {dimension_numbers = #tpu.dot_dimension_numbers<[1], [0], [0], [1], [0, 0, 1, 1], [], []>} : vector<16x32xbf16>, vector<32x32xbf16>, vector<16x32xf32> -> vector<16x32xf32>
    %c0_3 = arith.constant 0 : index
    %c0_4 = arith.constant 0 : index
    %4 = vector.load %arg4[%c0_3, %c0_4] : memref<1x32xf32, #tpu.memory_space<vmem>>, vector<1x32xf32>
    %5 = vector.broadcast %4 : vector<1x32xf32> to vector<16x32xf32>
    %6 = arith.addf %3, %5 : vector<16x32xf32>
    %c0_5 = arith.constant 0 : index
    %c0_6 = arith.constant 0 : index
    %7 = vector.load %arg2[%c0_5, %c0_6] : memref<16x32xf32, #tpu.memory_space<vmem>>, vector<16x32xf32>
    %8 = arith.addf %7, %6 : vector<16x32xf32>
    %c0_7 = arith.constant 0 : index
    %c0_8 = arith.constant 0 : index
    %9 = vector.load %arg5[%c0_7, %c0_8] : memref<1x32xf32, #tpu.memory_space<vmem>>, vector<1x32xf32>
    %c0_9 = arith.constant 0 : index
    %c0_10 = arith.constant 0 : index
    %10 = vector.load %arg6[%c0_9, %c0_10] : memref<1x32xf32, #tpu.memory_space<vmem>>, vector<1x32xf32>
    %cst_11 = arith.constant dense<0.000000e+00> : vector<16xf32>
    %11 = vector.multi_reduction <add>, %8, %cst_11 [1] : vector<16x32xf32> to vector<16xf32>
    %12 = vector.shape_cast %11 : vector<16xf32> to vector<16x1xf32>
    %cst_12 = arith.constant 3.200000e+01 : f32
    %13 = vector.broadcast %cst_12 : f32 to vector<16x1xf32>
    %14 = arith.divf %12, %13 : vector<16x1xf32>
    %15 = vector.broadcast %14 : vector<16x1xf32> to vector<16x32xf32>
    %16 = arith.subf %8, %15 : vector<16x32xf32>
    %17 = arith.mulf %16, %16 : vector<16x32xf32>
    %cst_13 = arith.constant dense<0.000000e+00> : vector<16xf32>
    %18 = vector.multi_reduction <add>, %17, %cst_13 [1] : vector<16x32xf32> to vector<16xf32>
    %19 = vector.shape_cast %18 : vector<16xf32> to vector<16x1xf32>
    %cst_14 = arith.constant 3.200000e+01 : f32
    %20 = vector.broadcast %cst_14 : f32 to vector<16x1xf32>
    %21 = arith.divf %19, %20 : vector<16x1xf32>
    %22 = vector.broadcast %14 : vector<16x1xf32> to vector<16x32xf32>
    %23 = arith.subf %8, %22 : vector<16x32xf32>
    %cst_15 = arith.constant 9.99999974E-6 : f32
    %24 = vector.broadcast %cst_15 : f32 to vector<16x1xf32>
    %25 = arith.addf %21, %24 : vector<16x1xf32>
    %26 = math.rsqrt %25 : vector<16x1xf32>
    %27 = vector.broadcast %26 : vector<16x1xf32> to vector<16x32xf32>
    %28 = arith.mulf %23, %27 : vector<16x32xf32>
    %29 = vector.broadcast %9 : vector<1x32xf32> to vector<16x32xf32>
    %30 = arith.mulf %28, %29 : vector<16x32xf32>
    %31 = vector.broadcast %10 : vector<1x32xf32> to vector<16x32xf32>
    %32 = arith.addf %30, %31 : vector<16x32xf32>
    %c0_16 = arith.constant 0 : index
    %c0_17 = arith.constant 0 : index
    %33 = vector.load %arg7[%c0_16, %c0_17] : memref<16x32xf32, #tpu.memory_space<vmem>>, vector<16x32xf32>
    tpu.vector_store %arg7[%c0_16, %c0_17], %32 {strides = array<i32>} : memref<16x32xf32, #tpu.memory_space<vmem>>, vector<16x32xf32>,
    return
  }
  func.func @transform_0(%arg0: i32) -> (i32, i32) {
    %c0_i32 = arith.constant 0 : i32
    %c0_i32_0 = arith.constant 0 : i32
    return %arg0, %c0_i32 : i32, i32
  }
  func.func @transform_1(%arg0: i32) -> (i32, i32) {
    %c0_i32 = arith.constant 0 : i32
    %c0_i32_0 = arith.constant 0 : i32
    return %arg0, %c0_i32 : i32, i32
  }
  func.func @transform_2(%arg0: i32) -> (i32, i32) {
    %c0_i32 = arith.constant 0 : i32
    %c0_i32_0 = arith.constant 0 : i32
    %c0_i32_1 = arith.constant 0 : i32
    return %c0_i32, %c0_i32_0 : i32, i32
  }
  func.func @transform_3(%arg0: i32) -> (i32, i32) {
    %c0_i32 = arith.constant 0 : i32
    %c0_i32_0 = arith.constant 0 : i32
    %c0_i32_1 = arith.constant 0 : i32
    return %c0_i32, %c0_i32_0 : i32, i32
  }
  func.func @transform_4(%arg0: i32) -> (i32, i32) {
    %c0_i32 = arith.constant 0 : i32
    %c0_i32_0 = arith.constant 0 : i32
    %c0_i32_1 = arith.constant 0 : i32
    return %c0_i32, %c0_i32_0 : i32, i32
  }
  func.func @transform_5(%arg0: i32) -> (i32, i32) {
    %c0_i32 = arith.constant 0 : i32
    %c0_i32_0 = arith.constant 0 : i32
    %c0_i32_1 = arith.constant 0 : i32
    return %c0_i32, %c0_i32_0 : i32, i32
  }
  func.func @transform_6(%arg0: i32) -> (i32, i32) {
    %c0_i32 = arith.constant 0 : i32
    %c0_i32_0 = arith.constant 0 : i32
    return %arg0, %c0_i32 : i32, i32
  }
}

module attributes {stable_mosaic.version = 11 : i64} {
  func.func @_ffn_add_ln_kernel(%arg0: i32, %arg1: memref<16x32xf32, #tpu.memory_space<vmem>>, %arg2: memref<32x64xbf16, #tpu.memory_space<vmem>>, %arg3: memref<1x64xf32, #tpu.memory_space<vmem>>, %arg4: memref<64x32xbf16, #tpu.memory_space<vmem>>, %arg5: memref<1x32xf32, #tpu.memory_space<vmem>>, %arg6: memref<1x32xf32, #tpu.memory_space<vmem>>, %arg7: memref<1x32xf32, #tpu.memory_space<vmem>>, %arg8: memref<16x32xf32, #tpu.memory_space<vmem>>) attributes {dimension_semantics = [#tpu.dimension_semantics<parallel>], iteration_bounds = array<i64: 1>, scalar_prefetch = 0 : i64, scratch_operands = 0 : i64, tpu.core_type = #tpu.core_type<tc>, window_params = [{transform_indices = @transform_0, window_bounds = array<i64: 16, 32>}, {pipeline_mode = #tpu.pipeline_mode<synchronous>, transform_indices = @transform_1, window_bounds = array<i64: 32, 64>}, {pipeline_mode = #tpu.pipeline_mode<synchronous>, transform_indices = @transform_2, window_bounds = array<i64: 1, 64>}, {pipeline_mode = #tpu.pipeline_mode<synchronous>, transform_indices = @transform_3, window_bounds = array<i64: 64, 32>}, {pipeline_mode = #tpu.pipeline_mode<synchronous>, transform_indices = @transform_4, window_bounds = array<i64: 1, 32>}, {pipeline_mode = #tpu.pipeline_mode<synchronous>, transform_indices = @transform_5, window_bounds = array<i64: 1, 32>}, {pipeline_mode = #tpu.pipeline_mode<synchronous>, transform_indices = @transform_6, window_bounds = array<i64: 1, 32>}, {transform_indices = @transform_7, window_bounds = array<i64: 16, 32>}]} {
    %c0 = arith.constant 0 : index
    %c0_0 = arith.constant 0 : index
    %0 = vector.load %arg1[%c0, %c0_0] : memref<16x32xf32, #tpu.memory_space<vmem>>, vector<16x32xf32>
    %1 = arith.truncf %0 : vector<16x32xf32> to vector<16x32xbf16>
    %c0_1 = arith.constant 0 : index
    %c0_2 = arith.constant 0 : index
    %2 = vector.load %arg2[%c0_1, %c0_2] : memref<32x64xbf16, #tpu.memory_space<vmem>>, vector<32x64xbf16>
    %cst = arith.constant dense<0.000000e+00> : vector<16x64xf32>
    %3 = tpu.matmul %1, %2, %cst {dimension_numbers = #tpu.dot_dimension_numbers<[1], [0], [0], [1], [0, 0, 1, 1], [], []>} : vector<16x32xbf16>, vector<32x64xbf16>, vector<16x64xf32> -> vector<16x64xf32>
    %c0_3 = arith.constant 0 : index
    %c0_4 = arith.constant 0 : index
    %4 = vector.load %arg3[%c0_3, %c0_4] : memref<1x64xf32, #tpu.memory_space<vmem>>, vector<1x64xf32>
    %5 = vector.broadcast %4 : vector<1x64xf32> to vector<16x64xf32>
    %6 = arith.addf %3, %5 : vector<16x64xf32>
    %cst_5 = arith.constant 0.000000e+00 : f32
    %7 = vector.broadcast %cst_5 : f32 to vector<16x64xf32>
    %8 = arith.maximumf %6, %7 : vector<16x64xf32>
    %9 = arith.truncf %8 : vector<16x64xf32> to vector<16x64xbf16>
    %c0_6 = arith.constant 0 : index
    %c0_7 = arith.constant 0 : index
    %10 = vector.load %arg4[%c0_6, %c0_7] : memref<64x32xbf16, #tpu.memory_space<vmem>>, vector<64x32xbf16>
    %cst_8 = arith.constant dense<0.000000e+00> : vector<16x32xf32>
    %11 = tpu.matmul %9, %10, %cst_8 {dimension_numbers = #tpu.dot_dimension_numbers<[1], [0], [0], [1], [0, 0, 1, 1], [], []>} : vector<16x64xbf16>, vector<64x32xbf16>, vector<16x32xf32> -> vector<16x32xf32>
    %c0_9 = arith.constant 0 : index
    %c0_10 = arith.constant 0 : index
    %12 = vector.load %arg5[%c0_9, %c0_10] : memref<1x32xf32, #tpu.memory_space<vmem>>, vector<1x32xf32>
    %13 = vector.broadcast %12 : vector<1x32xf32> to vector<16x32xf32>
    %14 = arith.addf %11, %13 : vector<16x32xf32>
    %15 = arith.addf %0, %14 : vector<16x32xf32>
    %c0_11 = arith.constant 0 : index
    %c0_12 = arith.constant 0 : index
    %16 = vector.load %arg6[%c0_11, %c0_12] : memref<1x32xf32, #tpu.memory_space<vmem>>, vector<1x32xf32>
    %c0_13 = arith.constant 0 : index
    %c0_14 = arith.constant 0 : index
    %17 = vector.load %arg7[%c0_13, %c0_14] : memref<1x32xf32, #tpu.memory_space<vmem>>, vector<1x32xf32>
    %cst_15 = arith.constant dense<0.000000e+00> : vector<16xf32>
    %18 = vector.multi_reduction <add>, %15, %cst_15 [1] : vector<16x32xf32> to vector<16xf32>
    %19 = vector.shape_cast %18 : vector<16xf32> to vector<16x1xf32>
    %cst_16 = arith.constant 3.200000e+01 : f32
    %20 = vector.broadcast %cst_16 : f32 to vector<16x1xf32>
    %21 = arith.divf %19, %20 : vector<16x1xf32>
    %22 = vector.broadcast %21 : vector<16x1xf32> to vector<16x32xf32>
    %23 = arith.subf %15, %22 : vector<16x32xf32>
    %24 = arith.mulf %23, %23 : vector<16x32xf32>
    %cst_17 = arith.constant dense<0.000000e+00> : vector<16xf32>
    %25 = vector.multi_reduction <add>, %24, %cst_17 [1] : vector<16x32xf32> to vector<16xf32>
    %26 = vector.shape_cast %25 : vector<16xf32> to vector<16x1xf32>
    %cst_18 = arith.constant 3.200000e+01 : f32
    %27 = vector.broadcast %cst_18 : f32 to vector<16x1xf32>
    %28 = arith.divf %26, %27 : vector<16x1xf32>
    %29 = vector.broadcast %21 : vector<16x1xf32> to vector<16x32xf32>
    %30 = arith.subf %15, %29 : vector<16x32xf32>
    %cst_19 = arith.constant 9.99999974E-6 : f32
    %31 = vector.broadcast %cst_19 : f32 to vector<16x1xf32>
    %32 = arith.addf %28, %31 : vector<16x1xf32>
    %33 = math.rsqrt %32 : vector<16x1xf32>
    %34 = vector.broadcast %33 : vector<16x1xf32> to vector<16x32xf32>
    %35 = arith.mulf %30, %34 : vector<16x32xf32>
    %36 = vector.broadcast %16 : vector<1x32xf32> to vector<16x32xf32>
    %37 = arith.mulf %35, %36 : vector<16x32xf32>
    %38 = vector.broadcast %17 : vector<1x32xf32> to vector<16x32xf32>
    %39 = arith.addf %37, %38 : vector<16x32xf32>
    %c0_20 = arith.constant 0 : index
    %c0_21 = arith.constant 0 : index
    %40 = vector.load %arg8[%c0_20, %c0_21] : memref<16x32xf32, #tpu.memory_space<vmem>>, vector<16x32xf32>
    tpu.vector_store %arg8[%c0_20, %c0_21], %39 {strides = array<i32>} : memref<16x32xf32, #tpu.memory_space<vmem>>, vector<16x32xf32>,
    return
  }
  func.func @transform_0(%arg0: i32) -> (i32, i32) {
    %c0_i32 = arith.constant 0 : i32
    %c0_i32_0 = arith.constant 0 : i32
    return %arg0, %c0_i32 : i32, i32
  }
  func.func @transform_1(%arg0: i32) -> (i32, i32) {
    %c0_i32 = arith.constant 0 : i32
    %c0_i32_0 = arith.constant 0 : i32
    %c0_i32_1 = arith.constant 0 : i32
    return %c0_i32, %c0_i32_0 : i32, i32
  }
  func.func @transform_2(%arg0: i32) -> (i32, i32) {
    %c0_i32 = arith.constant 0 : i32
    %c0_i32_0 = arith.constant 0 : i32
    %c0_i32_1 = arith.constant 0 : i32
    return %c0_i32, %c0_i32_0 : i32, i32
  }
  func.func @transform_3(%arg0: i32) -> (i32, i32) {
    %c0_i32 = arith.constant 0 : i32
    %c0_i32_0 = arith.constant 0 : i32
    %c0_i32_1 = arith.constant 0 : i32
    return %c0_i32, %c0_i32_0 : i32, i32
  }
  func.func @transform_4(%arg0: i32) -> (i32, i32) {
    %c0_i32 = arith.constant 0 : i32
    %c0_i32_0 = arith.constant 0 : i32
    %c0_i32_1 = arith.constant 0 : i32
    return %c0_i32, %c0_i32_0 : i32, i32
  }
  func.func @transform_5(%arg0: i32) -> (i32, i32) {
    %c0_i32 = arith.constant 0 : i32
    %c0_i32_0 = arith.constant 0 : i32
    %c0_i32_1 = arith.constant 0 : i32
    return %c0_i32, %c0_i32_0 : i32, i32
  }
  func.func @transform_6(%arg0: i32) -> (i32, i32) {
    %c0_i32 = arith.constant 0 : i32
    %c0_i32_0 = arith.constant 0 : i32
    %c0_i32_1 = arith.constant 0 : i32
    return %c0_i32, %c0_i32_0 : i32, i32
  }
  func.func @transform_7(%arg0: i32) -> (i32, i32) {
    %c0_i32 = arith.constant 0 : i32
    %c0_i32_0 = arith.constant 0 : i32
    return %arg0, %c0_i32 : i32, i32
  }
}

module attributes {stable_mosaic.version = 11 : i64} {
  func.func @_linear_kernel(%arg0: i32, %arg1: memref<16x32xf32, #tpu.memory_space<vmem>>, %arg2: memref<32x5xbf16, #tpu.memory_space<vmem>>, %arg3: memref<1x5xf32, #tpu.memory_space<vmem>>, %arg4: memref<16x5xf32, #tpu.memory_space<vmem>>) attributes {dimension_semantics = [#tpu.dimension_semantics<parallel>], iteration_bounds = array<i64: 1>, scalar_prefetch = 0 : i64, scratch_operands = 0 : i64, tpu.core_type = #tpu.core_type<tc>, window_params = [{transform_indices = @transform_0, window_bounds = array<i64: 16, 32>}, {pipeline_mode = #tpu.pipeline_mode<synchronous>, transform_indices = @transform_1, window_bounds = array<i64: 32, 5>}, {pipeline_mode = #tpu.pipeline_mode<synchronous>, transform_indices = @transform_2, window_bounds = array<i64: 1, 5>}, {transform_indices = @transform_3, window_bounds = array<i64: 16, 5>}]} {
    %c0 = arith.constant 0 : index
    %c0_0 = arith.constant 0 : index
    %0 = vector.load %arg1[%c0, %c0_0] : memref<16x32xf32, #tpu.memory_space<vmem>>, vector<16x32xf32>
    %1 = arith.truncf %0 : vector<16x32xf32> to vector<16x32xbf16>
    %c0_1 = arith.constant 0 : index
    %c0_2 = arith.constant 0 : index
    %2 = vector.load %arg2[%c0_1, %c0_2] : memref<32x5xbf16, #tpu.memory_space<vmem>>, vector<32x5xbf16>
    %cst = arith.constant dense<0.000000e+00> : vector<16x5xf32>
    %3 = tpu.matmul %1, %2, %cst {dimension_numbers = #tpu.dot_dimension_numbers<[1], [0], [0], [1], [0, 0, 1, 1], [], []>} : vector<16x32xbf16>, vector<32x5xbf16>, vector<16x5xf32> -> vector<16x5xf32>
    %c0_3 = arith.constant 0 : index
    %c0_4 = arith.constant 0 : index
    %4 = vector.load %arg3[%c0_3, %c0_4] : memref<1x5xf32, #tpu.memory_space<vmem>>, vector<1x5xf32>
    %5 = vector.broadcast %4 : vector<1x5xf32> to vector<16x5xf32>
    %6 = arith.addf %3, %5 : vector<16x5xf32>
    %c0_5 = arith.constant 0 : index
    %c0_6 = arith.constant 0 : index
    %7 = vector.load %arg4[%c0_5, %c0_6] : memref<16x5xf32, #tpu.memory_space<vmem>>, vector<16x5xf32>
    tpu.vector_store %arg4[%c0_5, %c0_6], %6 {strides = array<i32>} : memref<16x5xf32, #tpu.memory_space<vmem>>, vector<16x5xf32>,
    return
  }
  func.func @transform_0(%arg0: i32) -> (i32, i32) {
    %c0_i32 = arith.constant 0 : i32
    %c0_i32_0 = arith.constant 0 : i32
    return %arg0, %c0_i32 : i32, i32
  }
  func.func @transform_1(%arg0: i32) -> (i32, i32) {
    %c0_i32 = arith.constant 0 : i32
    %c0_i32_0 = arith.constant 0 : i32
    %c0_i32_1 = arith.constant 0 : i32
    return %c0_i32, %c0_i32_0 : i32, i32
  }
  func.func @transform_2(%arg0: i32) -> (i32, i32) {
    %c0_i32 = arith.constant 0 : i32
    %c0_i32_0 = arith.constant 0 : i32
    %c0_i32_1 = arith.constant 0 : i32
    return %c0_i32, %c0_i32_0 : i32, i32
  }
  func.func @transform_3(%arg0: i32) -> (i32, i32) {
    %c0_i32 = arith.constant 0 : i32
    %c0_i32_0 = arith.constant 0 : i32
    return %arg0, %c0_i32 : i32, i32
  }
}

</mosaic_0001>

<llo_original>
// kernel: transformer_classifier.11
$region0: #{transformer_classifier.11}
  #allocation0 [shape = 'u32[]', space=smem, size = 0x4, offset = 0x4, fixed_abs, tag = 'smem constant byte address 0x4 - core index']
  #allocation1 [shape = 'u32[144,128]{1,0:T(1,128)}', space=vmem, size = 0x12000, scoped, tag = 'internal scratch']
  %s0 = inlined_call_operand.vmem [shape: f32[16,32], index: 0, kind: input, shape index: {}]
  %s1 = inlined_call_operand.vmem [shape: bf16[32,96], index: 1, kind: input, shape index: {}]
  %s2 = inlined_call_operand.vmem [shape: f32[1,96], index: 2, kind: input, shape index: {}]
  %s3 = inlined_call_operand.vmem [shape: f32[16,96], index: 3, kind: output, shape index: {}]
  %s4 = sld [smem:[#allocation0]]
  $region22: #{transformer_classifier.11} parent=0
    _
  %s6 = ssub.s32 1, %s4
  %s7 = scalar_select 0, %s6, %s4
  // Predicated region
  $region2: #{transformer_classifier.11} parent=0 // pred_check
    _
  $region3: #{transformer_classifier.11} parent=0 // pred_check_branch
    %9 = sbr.rel (0) target = $region5
  $region4: #{transformer_classifier.11} parent=0 // pred_region
    _
  $region5: #{transformer_classifier.11} parent=0 // pred_fallthru
    _
  // Predicated region
  $region6: #{transformer_classifier.11} parent=0 // pred_check
    _
  $region7: #{transformer_classifier.11} parent=0 // pred_check_branch
    %11 = sbr.rel (0) target = $region9
  $region8: #{transformer_classifier.11} parent=0 // pred_region
    _
  $region9: #{transformer_classifier.11} parent=0 // pred_fallthru
    _
  // Predicated region
  $region10: #{transformer_classifier.11} parent=0 // pred_check
    _
  $region11: #{transformer_classifier.11} parent=0 // pred_check_branch
    %13 = sbr.rel (0) target = $region13
  $region12: #{transformer_classifier.11} parent=0 // pred_region
    _
  $region13: #{transformer_classifier.11} parent=0 // pred_fallthru
    _
  %v15 = vld [vmem:[%s0] sm:$0xff]
  %v16 = vld [vmem:[%s0 + $0x8] sm:$0xff]
  %v17 = vpack.c.bf16 %v16, %v15
  %v18 = vld [vmem:[%s1] sm:$0xf]
  %v19 = vld [vmem:[%s1 + $0x4] sm:$0xf]
  %v20 = vld [vmem:[%s1 + $0x8] sm:$0xf]
  %v21 = vld [vmem:[%s1 + $0xc] sm:$0xf]
  %v22 = vld [vmem:[%s2] sm:$0x1]
  %v24 = vlaneseq
  %v25 = vshrl.u32 %v24, 7
  %v26 = vsub.s32 0, %v25
  %v27 = vrot.slane %v22, %v26
  %v33 = vunpack.c.l.b16 %v18
  %v34 = vunpack.c.l.b16 %v19
  %v35 = vunpack.c.l.b16 %v20
  %v36 = vunpack.c.l.b16 %v21
  %v37 = vpack.c.b16 %v34, %v33
  %v38 = vpack.c.b16 %v36, %v35
  %vm41 = vcmask 261120
  %v43 = vsel %vm41, %v17, 0
  %45 = vmatprep.subr.bf16.mxu0 0
  %46 = vmatpush1.bf16.msra.mxu0 0
  %47 = vmatprep.subr.bf16.mxu0 0
  %48 = vmatpush1.bf16.msra.mxu0 0
  %49 = vmatprep.subr.bf16.mxu0 0
  %50 = vmatpush1.bf16.msra.mxu0 0
  %51 = vmatprep.subr.bf16.mxu0 0
  %52 = vmatpush1.bf16.msra.mxu0 0
  %53 = vmatprep.subr.bf16.mxu0 0
  %54 = vmatpush1.bf16.msra.mxu0 0
  %55 = vmatprep.subr.bf16.mxu0 0
  %56 = vmatpush1.bf16.msra.mxu0 0
  %57 = vmatprep.subr.bf16.mxu0 0
  %58 = vmatpush1.bf16.msra.mxu0 %v38
  %59 = vmatprep.subr.bf16.mxu0 0
  %60 = vmatpush1.bf16.msra.mxu0 %v37
  %61 = vmatprep.subr.bf16.mxu0 0
  %62 = vmatpush2.bf16.msra.mxu0 0
  %63 = vmatprep.subr.bf16.mxu0 0
  %64 = vmatpush2.bf16.msra.mxu0 0
  %65 = vmatprep.subr.bf16.mxu0 0
  %66 = vmatpush2.bf16.msra.mxu0 0
  %67 = vmatprep.subr.bf16.mxu0 0
  %68 = vmatpush2.bf16.msra.mxu0 0
  %69 = vmatprep.subr.bf16.mxu0 0
  %70 = vmatpush2.bf16.msra.mxu0 0
  %71 = vmatprep.subr.bf16.mxu0 0
  %72 = vmatpush2.bf16.msra.mxu0 0
  %73 = vmatprep.subr.bf16.mxu0 0
  %74 = vmatpush2.bf16.msra.mxu0 0
  %75 = vmatprep.subr.bf16.mxu0 0
  %76 = vmatpush2.bf16.msra.mxu0 0
  %77 = vmatprep.mubr.bf16.mxu0 0
  %78 = vmatmul.mubr.bf16.gmra.mxu0 %v43
  %v79 = vpop.f32.mrf.mxu0
  %v80 = vadd.f32 %v27, %v79
  %v81 = vpop.f32.mrf.mxu0
  %v82 = vpop.f32.mrf.mxu0
  %v83 = vadd.f32 %v27, %v82
  %v84 = vpop.f32.mrf.mxu0
  %85 = vdwg.mxu0
  %vm86 = vcmask 785408
  %87 = vst.msk [vmem:[%s3] sm:$0xff] %vm86, %v80
  %88 = vst.msk [vmem:[%s3 + $0x8] sm:$0xff] %vm86, %v83
  // Predicated region
  $region14: #{transformer_classifier.11} parent=0 // pred_check
    _
  $region15: #{transformer_classifier.11} parent=0 // pred_check_branch
    %90 = sbr.rel (0) target = $region17
  $region16: #{transformer_classifier.11} parent=0 // pred_region
    _
  $region17: #{transformer_classifier.11} parent=0 // pred_fallthru
    _
  // Predicated region
  $region18: #{transformer_classifier.11} parent=0 // pred_check
    _
  $region19: #{transformer_classifier.11} parent=0 // pred_check_branch
    %92 = sbr.rel (0) target = $region21
  $region20: #{transformer_classifier.11} parent=0 // pred_region
    _
  $region21: #{transformer_classifier.11} parent=0 // pred_fallthru
    _

// kernel: transformer_classifier.10
$region0: #{transformer_classifier.10}
  #allocation0 [shape = 'u32[]', space=smem, size = 0x4, offset = 0x4, fixed_abs, tag = 'smem constant byte address 0x4 - core index']
  #allocation1 [shape = 'u32[144,128]{1,0:T(1,128)}', space=vmem, size = 0x12000, scoped, tag = 'internal scratch']
  %s0 = inlined_call_operand.vmem [shape: f32[16,16], index: 0, kind: input, shape index: {}]
  %s1 = inlined_call_operand.vmem [shape: bf16[16,32], index: 1, kind: input, shape index: {}]
  %s2 = inlined_call_operand.vmem [shape: f32[1,32], index: 2, kind: input, shape index: {}]
  %s3 = inlined_call_operand.vmem [shape: f32[16,32], index: 3, kind: output, shape index: {}]
  %s4 = sld [smem:[#allocation0]]
  $region22: #{transformer_classifier.10} parent=0
    _
  %s6 = ssub.s32 1, %s4
  %s7 = scalar_select 0, %s6, %s4
  // Predicated region
  $region2: #{transformer_classifier.10} parent=0 // pred_check
    _
  $region3: #{transformer_classifier.10} parent=0 // pred_check_branch
    %9 = sbr.rel (0) target = $region5
  $region4: #{transformer_classifier.10} parent=0 // pred_region
    _
  $region5: #{transformer_classifier.10} parent=0 // pred_fallthru
    _
  // Predicated region
  $region6: #{transformer_classifier.10} parent=0 // pred_check
    _
  $region7: #{transformer_classifier.10} parent=0 // pred_check_branch
    %11 = sbr.rel (0) target = $region9
  $region8: #{transformer_classifier.10} parent=0 // pred_region
    _
  $region9: #{transformer_classifier.10} parent=0 // pred_fallthru
    _
  // Predicated region
  $region10: #{transformer_classifier.10} parent=0 // pred_check
    _
  $region11: #{transformer_classifier.10} parent=0 // pred_check_branch
    %13 = sbr.rel (0) target = $region13
  $region12: #{transformer_classifier.10} parent=0 // pred_region
    _
  $region13: #{transformer_classifier.10} parent=0 // pred_fallthru
    _
  %v15 = vld [vmem:[%s0] sm:$0xff]
  %v16 = vld [vmem:[%s0 + $0x8] sm:$0xff]
  %v17 = vpack.c.bf16 %v16, %v15
  %v18 = vld [vmem:[%s1] sm:$0xf]
  %v19 = vld [vmem:[%s1 + $0x4] sm:$0xf]
  %v20 = vld [vmem:[%s2] sm:$0x1]
  %v22 = vlaneseq
  %v23 = vshrl.u32 %v22, 7
  %v24 = vsub.s32 0, %v23
  %v25 = vrot.slane %v20, %v24
  %v29 = vunpack.c.l.b16 %v18
  %v30 = vunpack.c.l.b16 %v19
  %v31 = vpack.c.b16 %v30, %v29
  %vm33 = vcmask 130048
  %v35 = vsel %vm33, %v17, 0
  %37 = vmatprep.subr.bf16.mxu0 0
  %38 = vmatpush1.bf16.msra.mxu0 0
  %39 = vmatprep.subr.bf16.mxu0 0
  %40 = vmatpush1.bf16.msra.mxu0 0
  %41 = vmatprep.subr.bf16.mxu0 0
  %42 = vmatpush1.bf16.msra.mxu0 0
  %43 = vmatprep.subr.bf16.mxu0 0
  %44 = vmatpush1.bf16.msra.mxu0 0
  %45 = vmatprep.subr.bf16.mxu0 0
  %46 = vmatpush1.bf16.msra.mxu0 0
  %47 = vmatprep.subr.bf16.mxu0 0
  %48 = vmatpush1.bf16.msra.mxu0 0
  %49 = vmatprep.subr.bf16.mxu0 0
  %50 = vmatpush1.bf16.msra.mxu0 0
  %51 = vmatprep.subr.bf16.mxu0 0
  %52 = vmatpush1.bf16.msra.mxu0 %v31
  %53 = vmatprep.subr.bf16.mxu0 0
  %54 = vmatpush2.bf16.msra.mxu0 0
  %55 = vmatprep.subr.bf16.mxu0 0
  %56 = vmatpush2.bf16.msra.mxu0 0
  %57 = vmatprep.subr.bf16.mxu0 0
  %58 = vmatpush2.bf16.msra.mxu0 0
  %59 = vmatprep.subr.bf16.mxu0 0
  %60 = vmatpush2.bf16.msra.mxu0 0
  %61 = vmatprep.subr.bf16.mxu0 0
  %62 = vmatpush2.bf16.msra.mxu0 0
  %63 = vmatprep.subr.bf16.mxu0 0
  %64 = vmatpush2.bf16.msra.mxu0 0
  %65 = vmatprep.subr.bf16.mxu0 0
  %66 = vmatpush2.bf16.msra.mxu0 0
  %67 = vmatprep.subr.bf16.mxu0 0
  %68 = vmatpush2.bf16.msra.mxu0 0
  %69 = vmatprep.mubr.bf16.mxu0 0
  %70 = vmatmul.mubr.bf16.gmra.mxu0 %v35
  %v71 = vpop.f32.mrf.mxu0
  %v72 = vadd.f32 %v25, %v71
  %v73 = vpop.f32.mrf.mxu0
  %v74 = vpop.f32.mrf.mxu0
  %v75 = vadd.f32 %v25, %v74
  %v76 = vpop.f32.mrf.mxu0
  %77 = vdwg.mxu0
  %vm78 = vcmask 261120
  %79 = vst.msk [vmem:[%s3] sm:$0xff] %vm78, %v72
  %80 = vst.msk [vmem:[%s3 + $0x8] sm:$0xff] %vm78, %v75
  // Predicated region
  $region14: #{transformer_classifier.10} parent=0 // pred_check
    _
  $region15: #{transformer_classifier.10} parent=0 // pred_check_branch
    %82 = sbr.rel (0) target = $region17
  $region16: #{transformer_classifier.10} parent=0 // pred_region
    _
  $region17: #{transformer_classifier.10} parent=0 // pred_fallthru
    _
  // Predicated region
  $region18: #{transformer_classifier.10} parent=0 // pred_check
    _
  $region19: #{transformer_classifier.10} parent=0 // pred_check_branch
    %84 = sbr.rel (0) target = $region21
  $region20: #{transformer_classifier.10} parent=0 // pred_region
    _
  $region21: #{transformer_classifier.10} parent=0 // pred_fallthru
    _

// kernel: transformer_classifier.13
$region0: #{transformer_classifier.13}
  #allocation0 [shape = 'u32[]', space=smem, size = 0x4, offset = 0x4, fixed_abs, tag = 'smem constant byte address 0x4 - core index']
  #allocation1 [shape = 'u32[144,128]{1,0:T(1,128)}', space=vmem, size = 0x12000, scoped, tag = 'internal scratch']
  %s0 = inlined_call_operand.vmem [shape: f32[16,32], index: 0, kind: input, shape index: {}]
  %s1 = inlined_call_operand.vmem [shape: f32[16,32], index: 1, kind: input, shape index: {}]
  %s2 = inlined_call_operand.vmem [shape: bf16[32,32], index: 2, kind: input, shape index: {}]
  %s3 = inlined_call_operand.vmem [shape: f32[1,32], index: 3, kind: input, shape index: {}]
  %s4 = inlined_call_operand.vmem [shape: f32[1,32], index: 4, kind: input, shape index: {}]
  %s5 = inlined_call_operand.vmem [shape: f32[1,32], index: 5, kind: input, shape index: {}]
  %s6 = inlined_call_operand.vmem [shape: f32[16,32], index: 6, kind: output, shape index: {}]
  %s7 = sld [smem:[#allocation0]]
  $region34: #{transformer_classifier.13} parent=0
    _
  %s9 = ssub.s32 1, %s7
  %s10 = scalar_select 0, %s9, %s7
  // Predicated region
  $region2: #{transformer_classifier.13} parent=0 // pred_check
    _
  $region3: #{transformer_classifier.13} parent=0 // pred_check_branch
    %12 = sbr.rel (0) target = $region5
  $region4: #{transformer_classifier.13} parent=0 // pred_region
    _
  $region5: #{transformer_classifier.13} parent=0 // pred_fallthru
    _
  // Predicated region
  $region6: #{transformer_classifier.13} parent=0 // pred_check
    _
  $region7: #{transformer_classifier.13} parent=0 // pred_check_branch
    %14 = sbr.rel (0) target = $region9
  $region8: #{transformer_classifier.13} parent=0 // pred_region
    _
  $region9: #{transformer_classifier.13} parent=0 // pred_fallthru
    _
  // Predicated region
  $region10: #{transformer_classifier.13} parent=0 // pred_check
    _
  $region11: #{transformer_classifier.13} parent=0 // pred_check_branch
    %16 = sbr.rel (0) target = $region13
  $region12: #{transformer_classifier.13} parent=0 // pred_region
    _
  $region13: #{transformer_classifier.13} parent=0 // pred_fallthru
    _
  // Predicated region
  $region14: #{transformer_classifier.13} parent=0 // pred_check
    _
  $region15: #{transformer_classifier.13} parent=0 // pred_check_branch
    %18 = sbr.rel (0) target = $region17
  $region16: #{transformer_classifier.13} parent=0 // pred_region
    _
  $region17: #{transformer_classifier.13} parent=0 // pred_fallthru
    _
  // Predicated region
  $region18: #{transformer_classifier.13} parent=0 // pred_check
    _
  $region19: #{transformer_classifier.13} parent=0 // pred_check_branch
    %20 = sbr.rel (0) target = $region21
  $region20: #{transformer_classifier.13} parent=0 // pred_region
    _
  $region21: #{transformer_classifier.13} parent=0 // pred_fallthru
    _
  // Predicated region
  $region22: #{transformer_classifier.13} parent=0 // pred_check
    _
  $region23: #{transformer_classifier.13} parent=0 // pred_check_branch
    %22 = sbr.rel (0) target = $region25
  $region24: #{transformer_classifier.13} parent=0 // pred_region
    _
  $region25: #{transformer_classifier.13} parent=0 // pred_fallthru
    _
  %v24 = vld [vmem:[%s0] sm:$0xff]
  %v25 = vld [vmem:[%s0 + $0x8] sm:$0xff]
  %v26 = vpack.c.bf16 %v25, %v24
  %v27 = vld [vmem:[%s2] sm:$0xf]
  %v28 = vld [vmem:[%s2 + $0x4] sm:$0xf]
  %v29 = vld [vmem:[%s2 + $0x8] sm:$0xf]
  %v30 = vld [vmem:[%s2 + $0xc] sm:$0xf]
  %v31 = vld [vmem:[%s3] sm:$0x1]
  %v33 = vlaneseq
  %v34 = vshrl.u32 %v33, 7
  %v35 = vsub.s32 0, %v34
  %v36 = vrot.slane %v31, %v35
  %v42 = vunpack.c.l.b16 %v27
  %v43 = vunpack.c.l.b16 %v28
  %v44 = vunpack.c.l.b16 %v29
  %v45 = vunpack.c.l.b16 %v30
  %v46 = vpack.c.b16 %v43, %v42
  %v47 = vpack.c.b16 %v45, %v44
  %vm50 = vcmask 261120
  %v52 = vsel %vm50, %v26, 0
  %54 = vmatprep.subr.bf16.mxu0 0
  %55 = vmatpush1.bf16.msra.mxu0 0
  %56 = vmatprep.subr.bf16.mxu0 0
  %57 = vmatpush1.bf16.msra.mxu0 0
  %58 = vmatprep.subr.bf16.mxu0 0
  %59 = vmatpush1.bf16.msra.mxu0 0
  %60 = vmatprep.subr.bf16.mxu0 0
  %61 = vmatpush1.bf16.msra.mxu0 0
  %62 = vmatprep.subr.bf16.mxu0 0
  %63 = vmatpush1.bf16.msra.mxu0 0
  %64 = vmatprep.subr.bf16.mxu0 0
  %65 = vmatpush1.bf16.msra.mxu0 0
  %66 = vmatprep.subr.bf16.mxu0 0
  %67 = vmatpush1.bf16.msra.mxu0 %v47
  %68 = vmatprep.subr.bf16.mxu0 0
  %69 = vmatpush1.bf16.msra.mxu0 %v46
  %70 = vmatprep.subr.bf16.mxu0 0
  %71 = vmatpush2.bf16.msra.mxu0 0
  %72 = vmatprep.subr.bf16.mxu0 0
  %73 = vmatpush2.bf16.msra.mxu0 0
  %74 = vmatprep.subr.bf16.mxu0 0
  %75 = vmatpush2.bf16.msra.mxu0 0
  %76 = vmatprep.subr.bf16.mxu0 0
  %77 = vmatpush2.bf16.msra.mxu0 0
  %78 = vmatprep.subr.bf16.mxu0 0
  %79 = vmatpush2.bf16.msra.mxu0 0
  %80 = vmatprep.subr.bf16.mxu0 0
  %81 = vmatpush2.bf16.msra.mxu0 0
  %82 = vmatprep.subr.bf16.mxu0 0
  %83 = vmatpush2.bf16.msra.mxu0 0
  %84 = vmatprep.subr.bf16.mxu0 0
  %85 = vmatpush2.bf16.msra.mxu0 0
  %86 = vmatprep.mubr.bf16.mxu0 0
  %87 = vmatmul.mubr.bf16.gmra.mxu0 %v52
  %v88 = vpop.f32.mrf.mxu0
  %v89 = vadd.f32 %v36, %v88
  %v90 = vpop.f32.mrf.mxu0
  %v91 = vpop.f32.mrf.mxu0
  %v92 = vadd.f32 %v36, %v91
  %v93 = vpop.f32.mrf.mxu0
  %94 = vdwg.mxu0
  %v95 = vld [vmem:[%s1] sm:$0xff]
  %v96 = vld [vmem:[%s1 + $0x8] sm:$0xff]
  %v97 = vadd.f32 %v95, %v89
  %v98 = vadd.f32 %v96, %v92
  %v99 = vld [vmem:[%s4] sm:$0x1]
  %v100 = vld [vmem:[%s5] sm:$0x1]
  %v101 = vsel %vm50, %v97, 0.0
  %102 = vadd.xlane.f32.xlu0 %v101
  %v103 = vpop.xlane.xlu0 %102
  %v104 = vsel %vm50, %v98, 0.0
  %105 = vadd.xlane.f32.xlu0 %v104
  %v106 = vpop.xlane.xlu0 %105
  %v107 = vrcp.pop 32.0
  %v108 = vmul.f32 %v103, %v107
  %v109 = vmul.f32 %v106, %v107
  %v110 = vsub.f32 %v97, %v108
  %v111 = vsub.f32 %v98, %v109
  %v112 = vmul.f32 %v110, %v110
  %v113 = vmul.f32 %v111, %v111
  %v114 = vsel %vm50, %v112, 0.0
  %115 = vadd.xlane.f32.xlu0 %v114
  %v116 = vpop.xlane.xlu0 %115
  %v117 = vsel %vm50, %v113, 0.0
  %118 = vadd.xlane.f32.xlu0 %v117
  %v119 = vpop.xlane.xlu0 %118
  %v120 = vmul.f32 %v116, %v107
  %v121 = vmul.f32 %v119, %v107
  %v122 = vadd.f32 %v120, 1e-05
  %v123 = vadd.f32 %v121, 1e-05
  %v124 = vrsqrt.pop %v122
  %v125 = vrsqrt.pop %v123
  %v126 = vmul.f32 %v110, %v124
  %v127 = vmul.f32 %v111, %v125
  %v129 = vlaneseq
  %v130 = vshrl.u32 %v129, 7
  %v131 = vsub.s32 0, %v130
  %v132 = vrot.slane %v99, %v131
  %v134 = vmul.f32 %v126, %v132
  %v135 = vmul.f32 %v127, %v132
  %v137 = vlaneseq
  %v138 = vshrl.u32 %v137, 7
  %v139 = vsub.s32 0, %v138
  %v140 = vrot.slane %v100, %v139
  %v142 = vadd.f32 %v134, %v140
  %v143 = vadd.f32 %v135, %v140
  %144 = vst.msk [vmem:[%s6] sm:$0xff] %vm50, %v142
  %145 = vst.msk [vmem:[%s6 + $0x8] sm:$0xff] %vm50, %v143
  // Predicated region
  $region26: #{transformer_classifier.13} parent=0 // pred_check
    _
  $region27: #{transformer_classifier.13} parent=0 // pred_check_branch
    %147 = sbr.rel (0) target = $region29
  $region28: #{transformer_classifier.13} parent=0 // pred_region
    _
  $region29: #{transformer_classifier.13} parent=0 // pred_fallthru
    _
  // Predicated region
  $region30: #{transformer_classifier.13} parent=0 // pred_check
    _
  $region31: #{transformer_classifier.13} parent=0 // pred_check_branch
    %149 = sbr.rel (0) target = $region33
  $region32: #{transformer_classifier.13} parent=0 // pred_region
    _
  $region33: #{transformer_classifier.13} parent=0 // pred_fallthru
    _

// kernel: transformer_classifier.12
$region0: #{transformer_classifier.12}
  #allocation0 [shape = 'u32[]', space=smem, size = 0x4, offset = 0x4, fixed_abs, tag = 'smem constant byte address 0x4 - core index']
  #allocation1 [shape = 'u32[144,128]{1,0:T(1,128)}', space=vmem, size = 0x12000, scoped, tag = 'internal scratch']
  %s0 = inlined_call_operand.vmem [shape: f32[2,8,96], index: 0, kind: input, shape index: {}]
  %s1 = inlined_call_operand.vmem [shape: f32[2,1,8], index: 1, kind: input, shape index: {}]
  %s2 = inlined_call_operand.vmem [shape: f32[2,8,32], index: 2, kind: output, shape index: {}]
  %s3 = sld [smem:[#allocation0]]
  $region41: #{transformer_classifier.12} parent=0
    _
  %s5 = ssub.s32 1, %s3
  %s6 = scalar_select 0, %s5, %s3
  loop: start=0, step=1, limit=4
  $region2: #{transformer_classifier.12} parent=0 // loop_pre_header
    _
  $region3: #{transformer_classifier.12} parent=0 // loop_header
    %s8 = sphi 0, %s12
    %p9 = scmp.ge.s32.totalorder %s8, 4
    %s18 = sphi 0, %s20
    %s21 = sphi 0, %s18
    %s22 = sphi 0, %s21
    %s38 = sphi 0, %s22
    %s44 = sphi 0, %s46
    %s47 = sphi 0, %s44
    %s48 = sphi 0, %s47
    %s64 = sphi 0, %s48
    %s70 = sphi 0, %s72
    %s73 = sphi 0, %s70
    %s74 = sphi 0, %s73
    %s90 = sphi 0, %s74
  $region4: #{transformer_classifier.12} parent=0 // loop_header_branch
    %11 = sbr.rel (%p9) target = $region8
  $region5: #{transformer_classifier.12} parent=0 // loop_body
    %s13 = ssub.s32 %s8, 1
    %s14 = ssub.s32 %s8, 2
    %s15 = sadd.s32 %s8, 1
    %s16 = ssub.s32 %s8, %s15
    %p17 = scmp.eq.s32.totalorder %s16, 0
    %s19 = sadd.s32 %s18, 1
    %s20 = scalar_select %p17, %s18, %s19
    %p23 = pneg %p17
    %p24 = scmp.eq.s32.totalorder %s8, 1
    %p25 = por %p23, %p24
    %p26 = scmp.ne.s32.totalorder %s18, %s21
    %p27 = scmp.eq.s32.totalorder %s8, 0
    %p28 = por %p26, %p27
    %p29 = scmp.ne.s32.totalorder %s18, %s21
    %p30 = scmp.eq.s32.totalorder %s13, 1
    %p31 = por %p29, %p30
    %p32 = scmp.ne.s32.totalorder %s21, %s22
    %p33 = scmp.eq.s32.totalorder %s13, 0
    %p34 = por %p32, %p33
    %p35 = scmp.ne.s32.totalorder %s21, %s22
    %p36 = scmp.eq.s32.totalorder %s14, 1
    %p37 = por %p35, %p36
    %p39 = scmp.ne.s32.totalorder %s22, %s38
    %p40 = scmp.eq.s32.totalorder %s14, 0
    %p41 = por %p39, %p40
    %s42 = ssub.s32 %s8, %s15
    %p43 = scmp.eq.s32.totalorder %s42, 0
    %s45 = sadd.s32 %s44, 1
    %s46 = scalar_select %p43, %s44, %s45
    %p49 = pneg %p43
    %p50 = scmp.eq.s32.totalorder %s8, 1
    %p51 = por %p49, %p50
    %p52 = scmp.ne.s32.totalorder %s44, %s47
    %p53 = scmp.eq.s32.totalorder %s8, 0
    %p54 = por %p52, %p53
    %p55 = scmp.ne.s32.totalorder %s44, %s47
    %p56 = scmp.eq.s32.totalorder %s13, 1
    %p57 = por %p55, %p56
    %p58 = scmp.ne.s32.totalorder %s47, %s48
    %p59 = scmp.eq.s32.totalorder %s13, 0
    %p60 = por %p58, %p59
    %p61 = scmp.ne.s32.totalorder %s47, %s48
    %p62 = scmp.eq.s32.totalorder %s14, 1
    %p63 = por %p61, %p62
    %p65 = scmp.ne.s32.totalorder %s48, %s64
    %p66 = scmp.eq.s32.totalorder %s14, 0
    %p67 = por %p65, %p66
    %s68 = ssub.s32 %s8, %s15
    %p69 = scmp.eq.s32.totalorder %s68, 0
    %s71 = sadd.s32 %s70, 1
    %s72 = scalar_select %p69, %s70, %s71
    %p75 = pneg %p69
    %p76 = scmp.eq.s32.totalorder %s8, 1
    %p77 = por %p75, %p76
    %p78 = scmp.ne.s32.totalorder %s70, %s73
    %p79 = scmp.eq.s32.totalorder %s8, 0
    %p80 = por %p78, %p79
    %p81 = scmp.ne.s32.totalorder %s70, %s73
    %p82 = scmp.eq.s32.totalorder %s13, 1
    %p83 = por %p81, %p82
    %p84 = scmp.ne.s32.totalorder %s73, %s74
    %p85 = scmp.eq.s32.totalorder %s13, 0
    %p86 = por %p84, %p85
    %p87 = scmp.ne.s32.totalorder %s73, %s74
    %p88 = scmp.eq.s32.totalorder %s14, 1
    %p89 = por %p87, %p88
    %p91 = scmp.ne.s32.totalorder %s74, %s90
    %p92 = scmp.eq.s32.totalorder %s14, 0
    %p93 = por %p91, %p92
    %p94 = scmp.le.s32.totalorder 1, %s8
    %p95 = scmp.lt.s32.totalorder %s8, 3
    %p96 = pnand %p94, %p95
    %p97 = pneg %p96
    // Predicated region
    $region9: #{transformer_classifier.12} parent=5 // pred_check
      _
    $region10: #{transformer_classifier.12} parent=5 // pred_check_branch
      %99 = sbr.rel (%p96) target = $region12
    $region11: #{transformer_classifier.12} parent=5 // pred_region
      %s100 = ssub.s32 %s8, 1
    $region12: #{transformer_classifier.12} parent=5 // pred_fallthru
      _
    %p101 = scmp.lt.s32.totalorder %s8, 2
    // Predicated region
    $region13: #{transformer_classifier.12} parent=5 // pred_check
      %p102 = pneg %p101
    $region14: #{transformer_classifier.12} parent=5 // pred_check_branch
      %104 = sbr.rel (%p102) target = $region16
    $region15: #{transformer_classifier.12} parent=5 // pred_region
      // Predicated region
      $region17: #{transformer_classifier.12} parent=15 // pred_check
        %p105 = pneg %p28
      $region18: #{transformer_classifier.12} parent=15 // pred_check_branch
        %107 = sbr.rel (%p105) target = $region20
      $region19: #{transformer_classifier.12} parent=15 // pred_region
        %p108 = scmp.lt.s32.totalorder %s8, 1
        %s109 = scalar_select %p108, %s8, 1
        %s110 = smul.addr %s109, 8
        %s111 = scalar_lea.vmem %s0, %s110
      $region20: #{transformer_classifier.12} parent=15 // pred_fallthru
        _
      // Predicated region
      $region21: #{transformer_classifier.12} parent=15 // pred_check
        %p112 = pneg %p54
      $region22: #{transformer_classifier.12} parent=15 // pred_check_branch
        %114 = sbr.rel (%p112) target = $region24
      $region23: #{transformer_classifier.12} parent=15 // pred_region
        %p115 = scmp.lt.s32.totalorder %s8, 1
        %s116 = scalar_select %p115, %s8, 1
        %s117 = scalar_lea.vmem %s1, %s116
      $region24: #{transformer_classifier.12} parent=15 // pred_fallthru
        _
    $region16: #{transformer_classifier.12} parent=5 // pred_fallthru
      _
    %p118 = scmp.le.s32.totalorder 1, %s8
    %p119 = scmp.lt.s32.totalorder %s8, 3
    %p120 = pnand %p118, %p119
    %p121 = pneg %p120
    // Predicated region
    $region25: #{transformer_classifier.12} parent=5 // pred_check
      _
    $region26: #{transformer_classifier.12} parent=5 // pred_check_branch
      %123 = sbr.rel (%p120) target = $region28
    $region27: #{transformer_classifier.12} parent=5 // pred_region
      %s124 = ssub.s32 %s8, 1
      %p125 = scmp.lt.s32.totalorder %s13, 1
      %s126 = scalar_select %p125, %s13, 1
      %s127 = smul.addr %s126, 8
      %s128 = scalar_lea.vmem %s0, %s127
      %p129 = pneg %p34
      %p130 = pneg %p31
      %p131 = scmp.lt.s32.totalorder %s13, 1
      %s132 = scalar_select %p131, %s13, 1
      %s133 = scalar_lea.vmem %s1, %s132
      %p134 = pneg %p60
      %p135 = pneg %p57
      %p136 = pneg %p86
      %p137 = pneg %p83
      %p138 = scmp.lt.s32.totalorder %s13, 1
      %s139 = scalar_select %p138, %s13, 1
      %s140 = smul.addr %s139, 8
      %s141 = scalar_lea.vmem %s2, %s140
      %p142 = scmp.lt.s32.totalorder %s13, 1
      %s143 = scalar_select %p142, %s13, 1
      %s144 = smul.addr %s143, 8
      %s145 = scalar_lea.vmem %s0, %s144
      %p146 = scmp.lt.s32.totalorder %s13, 1
      %s147 = scalar_select %p146, %s13, 1
      %s148 = scalar_lea.vmem %s1, %s147
      %p149 = scmp.lt.s32.totalorder %s13, 1
      %s150 = scalar_select %p149, %s13, 1
      %s151 = smul.addr %s150, 8
      %s152 = scalar_lea.vmem %s2, %s151
      %v154 = vld [vmem:[%s145] sm:$0xff]
      %v155 = vld [vmem:[%s148] sm:$0x1]
      %v156 = vmul.f32 %v154, 0.35355338
      %v157 = vpack.c.bf16 %v156, %v156
      %v158 = vpack.c.bf16 %v154, %v154
      %v160 = vlaneseq
      %v161 = vshrl.u32 %v160, 7
      %v162 = vsub.s32 0, %v161
      %v163 = vrot.slane %v155, %v162
      %166 = vrot.lane.b32.xlu0 %v158, 96
      %v167 = vpop.permute.xlu0 %166
      %vm168 = vcmask 64512
      %v170 = vsel %vm168, %v157, 0
      %v173 = vsel %vm168, %v167, 0
      %175 = vmatprep.subr.bf16.mxu0 0
      %176 = vmatpush1.bf16.xpose.msra.mxu0 0
      %177 = vmatprep.subr.bf16.mxu0 0
      %178 = vmatpush1.bf16.xpose.msra.mxu0 0
      %179 = vmatprep.subr.bf16.mxu0 0
      %180 = vmatpush1.bf16.xpose.msra.mxu0 0
      %181 = vmatprep.subr.bf16.mxu0 0
      %182 = vmatpush1.bf16.xpose.msra.mxu0 0
      %183 = vmatprep.subr.bf16.mxu0 0
      %184 = vmatpush1.bf16.xpose.msra.mxu0 0
      %185 = vmatprep.subr.bf16.mxu0 0
      %186 = vmatpush1.bf16.xpose.msra.mxu0 0
      %187 = vmatprep.subr.bf16.mxu0 0
      %188 = vmatpush1.bf16.xpose.msra.mxu0 0
      %189 = vmatprep.subr.bf16.mxu0 0
      %190 = vmatpush1.bf16.xpose.msra.mxu0 %v173
      %191 = vmatprep.subr.bf16.mxu0 0
      %192 = vmatpush2.bf16.xpose.msra.mxu0 0
      %193 = vmatprep.subr.bf16.mxu0 0
      %194 = vmatpush2.bf16.xpose.msra.mxu0 0
      %195 = vmatprep.subr.bf16.mxu0 0
      %196 = vmatpush2.bf16.xpose.msra.mxu0 0
      %197 = vmatprep.subr.bf16.mxu0 0
      %198 = vmatpush2.bf16.xpose.msra.mxu0 0
      %199 = vmatprep.subr.bf16.mxu0 0
      %200 = vmatpush2.bf16.xpose.msra.mxu0 0
      %201 = vmatprep.subr.bf16.mxu0 0
      %202 = vmatpush2.bf16.xpose.msra.mxu0 0
      %203 = vmatprep.subr.bf16.mxu0 0
      %204 = vmatpush2.bf16.xpose.msra.mxu0 0
      %205 = vmatprep.subr.bf16.mxu0 0
      %206 = vmatpush2.bf16.xpose.msra.mxu0 0
      %207 = vmatprep.mubr.bf16.mxu0 0
      %208 = vmatmul.mubr.bf16.gmra.mxu0 %v170
      %v209 = vpop.f32.mrf.mxu0
      %v210 = vadd.f32 %v163, %v209
      %v211 = vpop.f32.mrf.mxu0
      %v212 = vpop.f32.mrf.mxu0
      %v213 = vpop.f32.mrf.mxu0
      %214 = vdwg.mxu0
      %v215 = vsel %vm168, %v210, -inf
      %216 = vmax.xlane.f32.xlu0 %v215
      %v217 = vpop.xlane.xlu0 %216
      %v218 = vsub.f32 %v210, %v217
      %v219 = vmul.f32 %v218, 1.442695
      %v220 = vpow.pop %v219
      %v221 = vsel %vm168, %v220, 0.0
      %222 = vadd.xlane.f32.xlu0 %v221
      %v223 = vpop.xlane.xlu0 %222
      %v224 = vrcp.pop %v223
      %v225 = vmul.f32 %v220, %v224
      %v226 = vpack.c.bf16 %v225, %v225
      %227 = vrot.lane.b32.xlu0 %v158, 64
      %v228 = vpop.permute.xlu0 %227
      %v230 = vsel %vm168, %v226, 0
      %vm232 = vcmask 1043456
      %v234 = vsel %vm232, %v228, 0
      %236 = vmatprep.subr.bf16.mxu0 0
      %237 = vmatpush1.bf16.msra.mxu0 0
      %238 = vmatprep.subr.bf16.mxu0 0
      %239 = vmatpush1.bf16.msra.mxu0 0
      %240 = vmatprep.subr.bf16.mxu0 0
      %241 = vmatpush1.bf16.msra.mxu0 0
      %242 = vmatprep.subr.bf16.mxu0 0
      %243 = vmatpush1.bf16.msra.mxu0 0
      %244 = vmatprep.subr.bf16.mxu0 0
      %245 = vmatpush1.bf16.msra.mxu0 0
      %246 = vmatprep.subr.bf16.mxu0 0
      %247 = vmatpush1.bf16.msra.mxu0 0
      %248 = vmatprep.subr.bf16.mxu0 0
      %249 = vmatpush1.bf16.msra.mxu0 0
      %250 = vmatprep.subr.bf16.mxu0 0
      %251 = vmatpush1.bf16.msra.mxu0 %v234
      %252 = vmatprep.subr.bf16.mxu0 0
      %253 = vmatpush2.bf16.msra.mxu0 0
      %254 = vmatprep.subr.bf16.mxu0 0
      %255 = vmatpush2.bf16.msra.mxu0 0
      %256 = vmatprep.subr.bf16.mxu0 0
      %257 = vmatpush2.bf16.msra.mxu0 0
      %258 = vmatprep.subr.bf16.mxu0 0
      %259 = vmatpush2.bf16.msra.mxu0 0
      %260 = vmatprep.subr.bf16.mxu0 0
      %261 = vmatpush2.bf16.msra.mxu0 0
      %262 = vmatprep.subr.bf16.mxu0 0
      %263 = vmatpush2.bf16.msra.mxu0 0
      %264 = vmatprep.subr.bf16.mxu0 0
      %265 = vmatpush2.bf16.msra.mxu0 0
      %266 = vmatprep.subr.bf16.mxu0 0
      %267 = vmatpush2.bf16.msra.mxu0 0
      %268 = vmatprep.mubr.bf16.mxu0 0
      %269 = vmatmul.mubr.bf16.gmra.mxu0 %v230
      %v270 = vpop.f32.mrf.mxu0
      %v271 = vadd.f32 0.0, %v270
      %v272 = vpop.f32.mrf.mxu0
      %v273 = vpop.f32.mrf.mxu0
      %v274 = vpop.f32.mrf.mxu0
      %275 = vdwg.mxu0
      %277 = vrot.lane.b32.xlu0 %v157, 120
      %v278 = vpop.permute.xlu0 %277
      %279 = vrot.lane.b32.xlu0 %v158, 88
      %v280 = vpop.permute.xlu0 %279
      %v282 = vsel %vm168, %v278, 0
      %v285 = vsel %vm168, %v280, 0
      %287 = vmatprep.subr.bf16.mxu0 0
      %288 = vmatpush1.bf16.xpose.msra.mxu0 0
      %289 = vmatprep.subr.bf16.mxu0 0
      %290 = vmatpush1.bf16.xpose.msra.mxu0 0
      %291 = vmatprep.subr.bf16.mxu0 0
      %292 = vmatpush1.bf16.xpose.msra.mxu0 0
      %293 = vmatprep.subr.bf16.mxu0 0
      %294 = vmatpush1.bf16.xpose.msra.mxu0 0
      %295 = vmatprep.subr.bf16.mxu0 0
      %296 = vmatpush1.bf16.xpose.msra.mxu0 0
      %297 = vmatprep.subr.bf16.mxu0 0
      %298 = vmatpush1.bf16.xpose.msra.mxu0 0
      %299 = vmatprep.subr.bf16.mxu0 0
      %300 = vmatpush1.bf16.xpose.msra.mxu0 0
      %301 = vmatprep.subr.bf16.mxu0 0
      %302 = vmatpush1.bf16.xpose.msra.mxu0 %v285
      %303 = vmatprep.subr.bf16.mxu0 0
      %304 = vmatpush2.bf16.xpose.msra.mxu0 0
      %305 = vmatprep.subr.bf16.mxu0 0
      %306 = vmatpush2.bf16.xpose.msra.mxu0 0
      %307 = vmatprep.subr.bf16.mxu0 0
      %308 = vmatpush2.bf16.xpose.msra.mxu0 0
      %309 = vmatprep.subr.bf16.mxu0 0
      %310 = vmatpush2.bf16.xpose.msra.mxu0 0
      %311 = vmatprep.subr.bf16.mxu0 0
      %312 = vmatpush2.bf16.xpose.msra.mxu0 0
      %313 = vmatprep.subr.bf16.mxu0 0
      %314 = vmatpush2.bf16.xpose.msra.mxu0 0
      %315 = vmatprep.subr.bf16.mxu0 0
      %316 = vmatpush2.bf16.xpose.msra.mxu0 0
      %317 = vmatprep.subr.bf16.mxu0 0
      %318 = vmatpush2.bf16.xpose.msra.mxu0 0
      %319 = vmatprep.mubr.bf16.mxu0 0
      %320 = vmatmul.mubr.bf16.gmra.mxu0 %v282
      %v321 = vpop.f32.mrf.mxu0
      %v322 = vadd.f32 %v163, %v321
      %v323 = vpop.f32.mrf.mxu0
      %v324 = vpop.f32.mrf.mxu0
      %v325 = vpop.f32.mrf.mxu0
      %326 = vdwg.mxu0
      %v327 = vsel %vm168, %v322, -inf
      %328 = vmax.xlane.f32.xlu0 %v327
      %v329 = vpop.xlane.xlu0 %328
      %v330 = vsub.f32 %v322, %v329
      %v331 = vmul.f32 %v330, 1.442695
      %v332 = vpow.pop %v331
      %v333 = vsel %vm168, %v332, 0.0
      %334 = vadd.xlane.f32.xlu0 %v333
      %v335 = vpop.xlane.xlu0 %334
      %v336 = vrcp.pop %v335
      %v337 = vmul.f32 %v332, %v336
      %v338 = vpack.c.bf16 %v337, %v337
      %339 = vrot.lane.b32.xlu0 %v158, 56
      %v340 = vpop.permute.xlu0 %339
      %v342 = vsel %vm168, %v338, 0
      %v345 = vsel %vm232, %v340, 0
      %347 = vmatprep.subr.bf16.mxu0 0
      %348 = vmatpush1.bf16.msra.mxu0 0
      %349 = vmatprep.subr.bf16.mxu0 0
      %350 = vmatpush1.bf16.msra.mxu0 0
      %351 = vmatprep.subr.bf16.mxu0 0
      %352 = vmatpush1.bf16.msra.mxu0 0
      %353 = vmatprep.subr.bf16.mxu0 0
      %354 = vmatpush1.bf16.msra.mxu0 0
      %355 = vmatprep.subr.bf16.mxu0 0
      %356 = vmatpush1.bf16.msra.mxu0 0
      %357 = vmatprep.subr.bf16.mxu0 0
      %358 = vmatpush1.bf16.msra.mxu0 0
      %359 = vmatprep.subr.bf16.mxu0 0
      %360 = vmatpush1.bf16.msra.mxu0 0
      %361 = vmatprep.subr.bf16.mxu0 0
      %362 = vmatpush1.bf16.msra.mxu0 %v345
      %363 = vmatprep.subr.bf16.mxu0 0
      %364 = vmatpush2.bf16.msra.mxu0 0
      %365 = vmatprep.subr.bf16.mxu0 0
      %366 = vmatpush2.bf16.msra.mxu0 0
      %367 = vmatprep.subr.bf16.mxu0 0
      %368 = vmatpush2.bf16.msra.mxu0 0
      %369 = vmatprep.subr.bf16.mxu0 0
      %370 = vmatpush2.bf16.msra.mxu0 0
      %371 = vmatprep.subr.bf16.mxu0 0
      %372 = vmatpush2.bf16.msra.mxu0 0
      %373 = vmatprep.subr.bf16.mxu0 0
      %374 = vmatpush2.bf16.msra.mxu0 0
      %375 = vmatprep.subr.bf16.mxu0 0
      %376 = vmatpush2.bf16.msra.mxu0 0
      %377 = vmatprep.subr.bf16.mxu0 0
      %378 = vmatpush2.bf16.msra.mxu0 0
      %379 = vmatprep.mubr.bf16.mxu0 0
      %380 = vmatmul.mubr.bf16.gmra.mxu0 %v342
      %v381 = vpop.f32.mrf.mxu0
      %v382 = vadd.f32 0.0, %v381
      %v383 = vpop.f32.mrf.mxu0
      %v384 = vpop.f32.mrf.mxu0
      %v385 = vpop.f32.mrf.mxu0
      %386 = vdwg.mxu0
      %387 = vrot.lane.b32.xlu0 %v157, 112
      %v388 = vpop.permute.xlu0 %387
      %389 = vrot.lane.b32.xlu0 %v158, 80
      %v390 = vpop.permute.xlu0 %389
      %v392 = vsel %vm168, %v388, 0
      %v395 = vsel %vm168, %v390, 0
      %397 = vmatprep.subr.bf16.mxu0 0
      %398 = vmatpush1.bf16.xpose.msra.mxu0 0
      %399 = vmatprep.subr.bf16.mxu0 0
      %400 = vmatpush1.bf16.xpose.msra.mxu0 0
      %401 = vmatprep.subr.bf16.mxu0 0
      %402 = vmatpush1.bf16.xpose.msra.mxu0 0
      %403 = vmatprep.subr.bf16.mxu0 0
      %404 = vmatpush1.bf16.xpose.msra.mxu0 0
      %405 = vmatprep.subr.bf16.mxu0 0
      %406 = vmatpush1.bf16.xpose.msra.mxu0 0
      %407 = vmatprep.subr.bf16.mxu0 0
      %408 = vmatpush1.bf16.xpose.msra.mxu0 0
      %409 = vmatprep.subr.bf16.mxu0 0
      %410 = vmatpush1.bf16.xpose.msra.mxu0 0
      %411 = vmatprep.subr.bf16.mxu0 0
      %412 = vmatpush1.bf16.xpose.msra.mxu0 %v395
      %413 = vmatprep.subr.bf16.mxu0 0
      %414 = vmatpush2.bf16.xpose.msra.mxu0 0
      %415 = vmatprep.subr.bf16.mxu0 0
      %416 = vmatpush2.bf16.xpose.msra.mxu0 0
      %417 = vmatprep.subr.bf16.mxu0 0
      %418 = vmatpush2.bf16.xpose.msra.mxu0 0
      %419 = vmatprep.subr.bf16.mxu0 0
      %420 = vmatpush2.bf16.xpose.msra.mxu0 0
      %421 = vmatprep.subr.bf16.mxu0 0
      %422 = vmatpush2.bf16.xpose.msra.mxu0 0
      %423 = vmatprep.subr.bf16.mxu0 0
      %424 = vmatpush2.bf16.xpose.msra.mxu0 0
      %425 = vmatprep.subr.bf16.mxu0 0
      %426 = vmatpush2.bf16.xpose.msra.mxu0 0
      %427 = vmatprep.subr.bf16.mxu0 0
      %428 = vmatpush2.bf16.xpose.msra.mxu0 0
      %429 = vmatprep.mubr.bf16.mxu0 0
      %430 = vmatmul.mubr.bf16.gmra.mxu0 %v392
      %v431 = vpop.f32.mrf.mxu0
      %v432 = vadd.f32 %v163, %v431
      %v433 = vpop.f32.mrf.mxu0
      %v434 = vpop.f32.mrf.mxu0
      %v435 = vpop.f32.mrf.mxu0
      %436 = vdwg.mxu0
      %v437 = vsel %vm168, %v432, -inf
      %438 = vmax.xlane.f32.xlu0 %v437
      %v439 = vpop.xlane.xlu0 %438
      %v440 = vsub.f32 %v432, %v439
      %v441 = vmul.f32 %v440, 1.442695
      %v442 = vpow.pop %v441
      %v443 = vsel %vm168, %v442, 0.0
      %444 = vadd.xlane.f32.xlu0 %v443
      %v445 = vpop.xlane.xlu0 %444
      %v446 = vrcp.pop %v445
      %v447 = vmul.f32 %v442, %v446
      %v448 = vpack.c.bf16 %v447, %v447
      %449 = vrot.lane.b32.xlu0 %v158, 48
      %v450 = vpop.permute.xlu0 %449
      %v452 = vsel %vm168, %v448, 0
      %v455 = vsel %vm232, %v450, 0
      %457 = vmatprep.subr.bf16.mxu0 0
      %458 = vmatpush1.bf16.msra.mxu0 0
      %459 = vmatprep.subr.bf16.mxu0 0
      %460 = vmatpush1.bf16.msra.mxu0 0
      %461 = vmatprep.subr.bf16.mxu0 0
      %462 = vmatpush1.bf16.msra.mxu0 0
      %463 = vmatprep.subr.bf16.mxu0 0
      %464 = vmatpush1.bf16.msra.mxu0 0
      %465 = vmatprep.subr.bf16.mxu0 0
      %466 = vmatpush1.bf16.msra.mxu0 0
      %467 = vmatprep.subr.bf16.mxu0 0
      %468 = vmatpush1.bf16.msra.mxu0 0
      %469 = vmatprep.subr.bf16.mxu0 0
      %470 = vmatpush1.bf16.msra.mxu0 0
      %471 = vmatprep.subr.bf16.mxu0 0
      %472 = vmatpush1.bf16.msra.mxu0 %v455
      %473 = vmatprep.subr.bf16.mxu0 0
      %474 = vmatpush2.bf16.msra.mxu0 0
      %475 = vmatprep.subr.bf16.mxu0 0
      %476 = vmatpush2.bf16.msra.mxu0 0
      %477 = vmatprep.subr.bf16.mxu0 0
      %478 = vmatpush2.bf16.msra.mxu0 0
      %479 = vmatprep.subr.bf16.mxu0 0
      %480 = vmatpush2.bf16.msra.mxu0 0
      %481 = vmatprep.subr.bf16.mxu0 0
      %482 = vmatpush2.bf16.msra.mxu0 0
      %483 = vmatprep.subr.bf16.mxu0 0
      %484 = vmatpush2.bf16.msra.mxu0 0
      %485 = vmatprep.subr.bf16.mxu0 0
      %486 = vmatpush2.bf16.msra.mxu0 0
      %487 = vmatprep.subr.bf16.mxu0 0
      %488 = vmatpush2.bf16.msra.mxu0 0
      %489 = vmatprep.mubr.bf16.mxu0 0
      %490 = vmatmul.mubr.bf16.gmra.mxu0 %v452
      %v491 = vpop.f32.mrf.mxu0
      %v492 = vadd.f32 0.0, %v491
      %v493 = vpop.f32.mrf.mxu0
      %v494 = vpop.f32.mrf.mxu0
      %v495 = vpop.f32.mrf.mxu0
      %496 = vdwg.mxu0
      %497 = vrot.lane.b32.xlu0 %v157, 104
      %v498 = vpop.permute.xlu0 %497
      %499 = vrot.lane.b32.xlu0 %v158, 72
      %v500 = vpop.permute.xlu0 %499
      %v502 = vsel %vm168, %v498, 0
      %v505 = vsel %vm168, %v500, 0
      %507 = vmatprep.subr.bf16.mxu0 0
      %508 = vmatpush1.bf16.xpose.msra.mxu0 0
      %509 = vmatprep.subr.bf16.mxu0 0
      %510 = vmatpush1.bf16.xpose.msra.mxu0 0
      %511 = vmatprep.subr.bf16.mxu0 0
      %512 = vmatpush1.bf16.xpose.msra.mxu0 0
      %513 = vmatprep.subr.bf16.mxu0 0
      %514 = vmatpush1.bf16.xpose.msra.mxu0 0
      %515 = vmatprep.subr.bf16.mxu0 0
      %516 = vmatpush1.bf16.xpose.msra.mxu0 0
      %517 = vmatprep.subr.bf16.mxu0 0
      %518 = vmatpush1.bf16.xpose.msra.mxu0 0
      %519 = vmatprep.subr.bf16.mxu0 0
      %520 = vmatpush1.bf16.xpose.msra.mxu0 0
      %521 = vmatprep.subr.bf16.mxu0 0
      %522 = vmatpush1.bf16.xpose.msra.mxu0 %v505
      %523 = vmatprep.subr.bf16.mxu0 0
      %524 = vmatpush2.bf16.xpose.msra.mxu0 0
      %525 = vmatprep.subr.bf16.mxu0 0
      %526 = vmatpush2.bf16.xpose.msra.mxu0 0
      %527 = vmatprep.subr.bf16.mxu0 0
      %528 = vmatpush2.bf16.xpose.msra.mxu0 0
      %529 = vmatprep.subr.bf16.mxu0 0
      %530 = vmatpush2.bf16.xpose.msra.mxu0 0
      %531 = vmatprep.subr.bf16.mxu0 0
      %532 = vmatpush2.bf16.xpose.msra.mxu0 0
      %533 = vmatprep.subr.bf16.mxu0 0
      %534 = vmatpush2.bf16.xpose.msra.mxu0 0
      %535 = vmatprep.subr.bf16.mxu0 0
      %536 = vmatpush2.bf16.xpose.msra.mxu0 0
      %537 = vmatprep.subr.bf16.mxu0 0
      %538 = vmatpush2.bf16.xpose.msra.mxu0 0
      %539 = vmatprep.mubr.bf16.mxu0 0
      %540 = vmatmul.mubr.bf16.gmra.mxu0 %v502
      %v541 = vpop.f32.mrf.mxu0
      %v542 = vadd.f32 %v163, %v541
      %v543 = vpop.f32.mrf.mxu0
      %v544 = vpop.f32.mrf.mxu0
      %v545 = vpop.f32.mrf.mxu0
      %546 = vdwg.mxu0
      %v547 = vsel %vm168, %v542, -inf
      %548 = vmax.xlane.f32.xlu0 %v547
      %v549 = vpop.xlane.xlu0 %548
      %v550 = vsub.f32 %v542, %v549
      %v551 = vmul.f32 %v550, 1.442695
      %v552 = vpow.pop %v551
      %v553 = vsel %vm168, %v552, 0.0
      %554 = vadd.xlane.f32.xlu0 %v553
      %v555 = vpop.xlane.xlu0 %554
      %v556 = vrcp.pop %v555
      %v557 = vmul.f32 %v552, %v556
      %v558 = vpack.c.bf16 %v557, %v557
      %559 = vrot.lane.b32.xlu0 %v158, 40
      %v560 = vpop.permute.xlu0 %559
      %v562 = vsel %vm168, %v558, 0
      %v565 = vsel %vm232, %v560, 0
      %567 = vmatprep.subr.bf16.mxu0 0
      %568 = vmatpush1.bf16.msra.mxu0 0
      %569 = vmatprep.subr.bf16.mxu0 0
      %570 = vmatpush1.bf16.msra.mxu0 0
      %571 = vmatprep.subr.bf16.mxu0 0
      %572 = vmatpush1.bf16.msra.mxu0 0
      %573 = vmatprep.subr.bf16.mxu0 0
      %574 = vmatpush1.bf16.msra.mxu0 0
      %575 = vmatprep.subr.bf16.mxu0 0
      %576 = vmatpush1.bf16.msra.mxu0 0
      %577 = vmatprep.subr.bf16.mxu0 0
      %578 = vmatpush1.bf16.msra.mxu0 0
      %579 = vmatprep.subr.bf16.mxu0 0
      %580 = vmatpush1.bf16.msra.mxu0 0
      %581 = vmatprep.subr.bf16.mxu0 0
      %582 = vmatpush1.bf16.msra.mxu0 %v565
      %583 = vmatprep.subr.bf16.mxu0 0
      %584 = vmatpush2.bf16.msra.mxu0 0
      %585 = vmatprep.subr.bf16.mxu0 0
      %586 = vmatpush2.bf16.msra.mxu0 0
      %587 = vmatprep.subr.bf16.mxu0 0
      %588 = vmatpush2.bf16.msra.mxu0 0
      %589 = vmatprep.subr.bf16.mxu0 0
      %590 = vmatpush2.bf16.msra.mxu0 0
      %591 = vmatprep.subr.bf16.mxu0 0
      %592 = vmatpush2.bf16.msra.mxu0 0
      %593 = vmatprep.subr.bf16.mxu0 0
      %594 = vmatpush2.bf16.msra.mxu0 0
      %595 = vmatprep.subr.bf16.mxu0 0
      %596 = vmatpush2.bf16.msra.mxu0 0
      %597 = vmatprep.subr.bf16.mxu0 0
      %598 = vmatpush2.bf16.msra.mxu0 0
      %599 = vmatprep.mubr.bf16.mxu0 0
      %600 = vmatmul.mubr.bf16.gmra.mxu0 %v562
      %v601 = vpop.f32.mrf.mxu0
      %v602 = vadd.f32 0.0, %v601
      %v603 = vpop.f32.mrf.mxu0
      %v604 = vpop.f32.mrf.mxu0
      %v605 = vpop.f32.mrf.mxu0
      %606 = vdwg.mxu0
      %608 = vrot.lane.b32.xlu0 %v382, 8
      %v609 = vpop.permute.xlu0 %608
      %612 = vrot.lane.b32.xlu0 %v492, 16
      %v613 = vpop.permute.xlu0 %612
      %616 = vrot.lane.b32.xlu0 %v602, 24
      %v617 = vpop.permute.xlu0 %616
      %v619 = vsel %vm168, %v271, %v609
      %vm620 = vcmask 130048
      %v621 = vsel %vm620, %v619, %v613
      %vm622 = vcmask 195584
      %v623 = vsel %vm622, %v621, %v617
      %vm624 = vcmask 261120
      %625 = vst.msk [vmem:[%s152] sm:$0xff] %vm624, %v623
      %p626 = scmp.lt.s32.totalorder %s13, 1
      %s627 = scalar_select %p626, %s13, 1
      %s628 = smul.addr %s627, 8
      %s629 = scalar_lea.vmem %s2, %s628
      // Predicated region
      $region29: #{transformer_classifier.12} parent=27 // pred_check
        %p630 = pneg %p83
      $region30: #{transformer_classifier.12} parent=27 // pred_check_branch
        %632 = sbr.rel (%p630) target = $region32
      $region31: #{transformer_classifier.12} parent=27 // pred_region
        _
      $region32: #{transformer_classifier.12} parent=27 // pred_fallthru
        _
    $region28: #{transformer_classifier.12} parent=5 // pred_fallthru
      _
    %p633 = scmp.le.s32.totalorder 2, %s8
    // Predicated region
    $region33: #{transformer_classifier.12} parent=5 // pred_check
      %p634 = pneg %p633
    $region34: #{transformer_classifier.12} parent=5 // pred_check_branch
      %636 = sbr.rel (%p634) target = $region36
    $region35: #{transformer_classifier.12} parent=5 // pred_region
      %s637 = ssub.s32 %s8, 2
      // Predicated region
      $region37: #{transformer_classifier.12} parent=35 // pred_check
        %p638 = pneg %p89
      $region38: #{transformer_classifier.12} parent=35 // pred_check_branch
        %640 = sbr.rel (%p638) target = $region40
      $region39: #{transformer_classifier.12} parent=35 // pred_region
        %p641 = scmp.lt.s32.totalorder %s14, 1
        %s642 = scalar_select %p641, %s14, 1
        %s643 = smul.addr %s642, 8
        %s644 = scalar_lea.vmem %s2, %s643
      $region40: #{transformer_classifier.12} parent=35 // pred_fallthru
        _
    $region36: #{transformer_classifier.12} parent=5 // pred_fallthru
      _
  $region6: #{transformer_classifier.12} parent=0 // loop_footer
    %s12 = sadd.s32 1, %s8
  $region7: #{transformer_classifier.12} parent=0 // loop_footer_branch
    %7 = sbr.rel target = $region3
  $region8: #{transformer_classifier.12} parent=0 // loop_exit
    _

// kernel: transformer_classifier.14
$region0: #{transformer_classifier.14}
  #allocation0 [shape = 'u32[]', space=smem, size = 0x4, offset = 0x4, fixed_abs, tag = 'smem constant byte address 0x4 - core index']
  #allocation1 [shape = 'u32[144,128]{1,0:T(1,128)}', space=vmem, size = 0x12000, scoped, tag = 'internal scratch']
  %s0 = inlined_call_operand.vmem [shape: f32[16,32], index: 0, kind: input, shape index: {}]
  %s1 = inlined_call_operand.vmem [shape: bf16[32,64], index: 1, kind: input, shape index: {}]
  %s2 = inlined_call_operand.vmem [shape: f32[1,64], index: 2, kind: input, shape index: {}]
  %s3 = inlined_call_operand.vmem [shape: bf16[64,32], index: 3, kind: input, shape index: {}]
  %s4 = inlined_call_operand.vmem [shape: f32[1,32], index: 4, kind: input, shape index: {}]
  %s5 = inlined_call_operand.vmem [shape: f32[1,32], index: 5, kind: input, shape index: {}]
  %s6 = inlined_call_operand.vmem [shape: f32[1,32], index: 6, kind: input, shape index: {}]
  %s7 = inlined_call_operand.vmem [shape: f32[16,32], index: 7, kind: output, shape index: {}]
  %s8 = sld [smem:[#allocation0]]
  $region38: #{transformer_classifier.14} parent=0
    _
  %s10 = ssub.s32 1, %s8
  %s11 = scalar_select 0, %s10, %s8
  // Predicated region
  $region2: #{transformer_classifier.14} parent=0 // pred_check
    _
  $region3: #{transformer_classifier.14} parent=0 // pred_check_branch
    %13 = sbr.rel (0) target = $region5
  $region4: #{transformer_classifier.14} parent=0 // pred_region
    _
  $region5: #{transformer_classifier.14} parent=0 // pred_fallthru
    _
  // Predicated region
  $region6: #{transformer_classifier.14} parent=0 // pred_check
    _
  $region7: #{transformer_classifier.14} parent=0 // pred_check_branch
    %15 = sbr.rel (0) target = $region9
  $region8: #{transformer_classifier.14} parent=0 // pred_region
    _
  $region9: #{transformer_classifier.14} parent=0 // pred_fallthru
    _
  // Predicated region
  $region10: #{transformer_classifier.14} parent=0 // pred_check
    _
  $region11: #{transformer_classifier.14} parent=0 // pred_check_branch
    %17 = sbr.rel (0) target = $region13
  $region12: #{transformer_classifier.14} parent=0 // pred_region
    _
  $region13: #{transformer_classifier.14} parent=0 // pred_fallthru
    _
  // Predicated region
  $region14: #{transformer_classifier.14} parent=0 // pred_check
    _
  $region15: #{transformer_classifier.14} parent=0 // pred_check_branch
    %19 = sbr.rel (0) target = $region17
  $region16: #{transformer_classifier.14} parent=0 // pred_region
    _
  $region17: #{transformer_classifier.14} parent=0 // pred_fallthru
    _
  // Predicated region
  $region18: #{transformer_classifier.14} parent=0 // pred_check
    _
  $region19: #{transformer_classifier.14} parent=0 // pred_check_branch
    %21 = sbr.rel (0) target = $region21
  $region20: #{transformer_classifier.14} parent=0 // pred_region
    _
  $region21: #{transformer_classifier.14} parent=0 // pred_fallthru
    _
  // Predicated region
  $region22: #{transformer_classifier.14} parent=0 // pred_check
    _
  $region23: #{transformer_classifier.14} parent=0 // pred_check_branch
    %23 = sbr.rel (0) target = $region25
  $region24: #{transformer_classifier.14} parent=0 // pred_region
    _
  $region25: #{transformer_classifier.14} parent=0 // pred_fallthru
    _
  // Predicated region
  $region26: #{transformer_classifier.14} parent=0 // pred_check
    _
  $region27: #{transformer_classifier.14} parent=0 // pred_check_branch
    %25 = sbr.rel (0) target = $region29
  $region28: #{transformer_classifier.14} parent=0 // pred_region
    _
  $region29: #{transformer_classifier.14} parent=0 // pred_fallthru
    _
  %v27 = vld [vmem:[%s0] sm:$0xff]
  %v28 = vld [vmem:[%s0 + $0x8] sm:$0xff]
  %v29 = vpack.c.bf16 %v28, %v27
  %v30 = vld [vmem:[%s1] sm:$0xf]
  %v31 = vld [vmem:[%s1 + $0x4] sm:$0xf]
  %v32 = vld [vmem:[%s1 + $0x8] sm:$0xf]
  %v33 = vld [vmem:[%s1 + $0xc] sm:$0xf]
  %v34 = vld [vmem:[%s2] sm:$0x1]
  %v36 = vlaneseq
  %v37 = vshrl.u32 %v36, 7
  %v38 = vsub.s32 0, %v37
  %v39 = vrot.slane %v34, %v38
  %v45 = vunpack.c.l.b16 %v30
  %v46 = vunpack.c.l.b16 %v31
  %v47 = vunpack.c.l.b16 %v32
  %v48 = vunpack.c.l.b16 %v33
  %v49 = vpack.c.b16 %v46, %v45
  %v50 = vpack.c.b16 %v48, %v47
  %vm53 = vcmask 261120
  %v55 = vsel %vm53, %v29, 0
  %57 = vmatprep.subr.bf16.mxu0 0
  %58 = vmatpush1.bf16.msra.mxu0 0
  %59 = vmatprep.subr.bf16.mxu0 0
  %60 = vmatpush1.bf16.msra.mxu0 0
  %61 = vmatprep.subr.bf16.mxu0 0
  %62 = vmatpush1.bf16.msra.mxu0 0
  %63 = vmatprep.subr.bf16.mxu0 0
  %64 = vmatpush1.bf16.msra.mxu0 0
  %65 = vmatprep.subr.bf16.mxu0 0
  %66 = vmatpush1.bf16.msra.mxu0 0
  %67 = vmatprep.subr.bf16.mxu0 0
  %68 = vmatpush1.bf16.msra.mxu0 0
  %69 = vmatprep.subr.bf16.mxu0 0
  %70 = vmatpush1.bf16.msra.mxu0 %v50
  %71 = vmatprep.subr.bf16.mxu0 0
  %72 = vmatpush1.bf16.msra.mxu0 %v49
  %73 = vmatprep.subr.bf16.mxu0 0
  %74 = vmatpush2.bf16.msra.mxu0 0
  %75 = vmatprep.subr.bf16.mxu0 0
  %76 = vmatpush2.bf16.msra.mxu0 0
  %77 = vmatprep.subr.bf16.mxu0 0
  %78 = vmatpush2.bf16.msra.mxu0 0
  %79 = vmatprep.subr.bf16.mxu0 0
  %80 = vmatpush2.bf16.msra.mxu0 0
  %81 = vmatprep.subr.bf16.mxu0 0
  %82 = vmatpush2.bf16.msra.mxu0 0
  %83 = vmatprep.subr.bf16.mxu0 0
  %84 = vmatpush2.bf16.msra.mxu0 0
  %85 = vmatprep.subr.bf16.mxu0 0
  %86 = vmatpush2.bf16.msra.mxu0 0
  %87 = vmatprep.subr.bf16.mxu0 0
  %88 = vmatpush2.bf16.msra.mxu0 0
  %89 = vmatprep.mubr.bf16.mxu0 0
  %90 = vmatmul.mubr.bf16.gmra.mxu0 %v55
  %v91 = vpop.f32.mrf.mxu0
  %v92 = vadd.f32 %v39, %v91
  %v93 = vpop.f32.mrf.mxu0
  %v94 = vpop.f32.mrf.mxu0
  %v95 = vadd.f32 %v39, %v94
  %v96 = vpop.f32.mrf.mxu0
  %97 = vdwg.mxu0
  %v98 = vmax.f32 %v92, 0.0
  %v99 = vmax.f32 %v95, 0.0
  %v100 = vpack.c.bf16 %v99, %v98
  %v101 = vld [vmem:[%s3] sm:$0xf]
  %v102 = vld [vmem:[%s3 + $0x4] sm:$0xf]
  %v103 = vld [vmem:[%s3 + $0x8] sm:$0xf]
  %v104 = vld [vmem:[%s3 + $0xc] sm:$0xf]
  %v105 = vld [vmem:[%s3 + $0x10] sm:$0xf]
  %v106 = vld [vmem:[%s3 + $0x14] sm:$0xf]
  %v107 = vld [vmem:[%s3 + $0x18] sm:$0xf]
  %v108 = vld [vmem:[%s3 + $0x1c] sm:$0xf]
  %v109 = vld [vmem:[%s4] sm:$0x1]
  %v111 = vlaneseq
  %v112 = vshrl.u32 %v111, 7
  %v113 = vsub.s32 0, %v112
  %v114 = vrot.slane %v109, %v113
  %v124 = vunpack.c.l.b16 %v101
  %v125 = vunpack.c.l.b16 %v102
  %v126 = vunpack.c.l.b16 %v103
  %v127 = vunpack.c.l.b16 %v104
  %v128 = vunpack.c.l.b16 %v105
  %v129 = vunpack.c.l.b16 %v106
  %v130 = vunpack.c.l.b16 %v107
  %v131 = vunpack.c.l.b16 %v108
  %v132 = vpack.c.b16 %v125, %v124
  %v133 = vpack.c.b16 %v127, %v126
  %v134 = vpack.c.b16 %v129, %v128
  %v135 = vpack.c.b16 %v131, %v130
  %vm140 = vcmask 523264
  %v142 = vsel %vm140, %v100, 0
  %144 = vmatprep.subr.bf16.mxu0 0
  %145 = vmatpush1.bf16.msra.mxu0 0
  %146 = vmatprep.subr.bf16.mxu0 0
  %147 = vmatpush1.bf16.msra.mxu0 0
  %148 = vmatprep.subr.bf16.mxu0 0
  %149 = vmatpush1.bf16.msra.mxu0 0
  %150 = vmatprep.subr.bf16.mxu0 0
  %151 = vmatpush1.bf16.msra.mxu0 0
  %152 = vmatprep.subr.bf16.mxu0 0
  %153 = vmatpush1.bf16.msra.mxu0 %v135
  %154 = vmatprep.subr.bf16.mxu0 0
  %155 = vmatpush1.bf16.msra.mxu0 %v134
  %156 = vmatprep.subr.bf16.mxu0 0
  %157 = vmatpush1.bf16.msra.mxu0 %v133
  %158 = vmatprep.subr.bf16.mxu0 0
  %159 = vmatpush1.bf16.msra.mxu0 %v132
  %160 = vmatprep.subr.bf16.mxu0 0
  %161 = vmatpush2.bf16.msra.mxu0 0
  %162 = vmatprep.subr.bf16.mxu0 0
  %163 = vmatpush2.bf16.msra.mxu0 0
  %164 = vmatprep.subr.bf16.mxu0 0
  %165 = vmatpush2.bf16.msra.mxu0 0
  %166 = vmatprep.subr.bf16.mxu0 0
  %167 = vmatpush2.bf16.msra.mxu0 0
  %168 = vmatprep.subr.bf16.mxu0 0
  %169 = vmatpush2.bf16.msra.mxu0 0
  %170 = vmatprep.subr.bf16.mxu0 0
  %171 = vmatpush2.bf16.msra.mxu0 0
  %172 = vmatprep.subr.bf16.mxu0 0
  %173 = vmatpush2.bf16.msra.mxu0 0
  %174 = vmatprep.subr.bf16.mxu0 0
  %175 = vmatpush2.bf16.msra.mxu0 0
  %176 = vmatprep.mubr.bf16.mxu0 0
  %177 = vmatmul.mubr.bf16.gmra.mxu0 %v142
  %v178 = vpop.f32.mrf.mxu0
  %v179 = vadd.f32 %v114, %v178
  %v180 = vpop.f32.mrf.mxu0
  %v181 = vpop.f32.mrf.mxu0
  %v182 = vadd.f32 %v114, %v181
  %v183 = vpop.f32.mrf.mxu0
  %184 = vdwg.mxu0
  %v185 = vadd.f32 %v27, %v179
  %v186 = vadd.f32 %v28, %v182
  %v187 = vld [vmem:[%s5] sm:$0x1]
  %v188 = vld [vmem:[%s6] sm:$0x1]
  %v189 = vsel %vm53, %v185, 0.0
  %190 = vadd.xlane.f32.xlu0 %v189
  %v191 = vpop.xlane.xlu0 %190
  %v192 = vsel %vm53, %v186, 0.0
  %193 = vadd.xlane.f32.xlu0 %v192
  %v194 = vpop.xlane.xlu0 %193
  %v195 = vrcp.pop 32.0
  %v196 = vmul.f32 %v191, %v195
  %v197 = vmul.f32 %v194, %v195
  %v198 = vsub.f32 %v185, %v196
  %v199 = vsub.f32 %v186, %v197
  %v200 = vmul.f32 %v198, %v198
  %v201 = vmul.f32 %v199, %v199
  %v202 = vsel %vm53, %v200, 0.0
  %203 = vadd.xlane.f32.xlu0 %v202
  %v204 = vpop.xlane.xlu0 %203
  %v205 = vsel %vm53, %v201, 0.0
  %206 = vadd.xlane.f32.xlu0 %v205
  %v207 = vpop.xlane.xlu0 %206
  %v208 = vmul.f32 %v204, %v195
  %v209 = vmul.f32 %v207, %v195
  %v210 = vadd.f32 %v208, 1e-05
  %v211 = vadd.f32 %v209, 1e-05
  %v212 = vrsqrt.pop %v210
  %v213 = vrsqrt.pop %v211
  %v214 = vmul.f32 %v198, %v212
  %v215 = vmul.f32 %v199, %v213
  %v217 = vlaneseq
  %v218 = vshrl.u32 %v217, 7
  %v219 = vsub.s32 0, %v218
  %v220 = vrot.slane %v187, %v219
  %v222 = vmul.f32 %v214, %v220
  %v223 = vmul.f32 %v215, %v220
  %v225 = vlaneseq
  %v226 = vshrl.u32 %v225, 7
  %v227 = vsub.s32 0, %v226
  %v228 = vrot.slane %v188, %v227
  %v230 = vadd.f32 %v222, %v228
  %v231 = vadd.f32 %v223, %v228
  %232 = vst.msk [vmem:[%s7] sm:$0xff] %vm53, %v230
  %233 = vst.msk [vmem:[%s7 + $0x8] sm:$0xff] %vm53, %v231
  // Predicated region
  $region30: #{transformer_classifier.14} parent=0 // pred_check
    _
  $region31: #{transformer_classifier.14} parent=0 // pred_check_branch
    %235 = sbr.rel (0) target = $region33
  $region32: #{transformer_classifier.14} parent=0 // pred_region
    _
  $region33: #{transformer_classifier.14} parent=0 // pred_fallthru
    _
  // Predicated region
  $region34: #{transformer_classifier.14} parent=0 // pred_check
    _
  $region35: #{transformer_classifier.14} parent=0 // pred_check_branch
    %237 = sbr.rel (0) target = $region37
  $region36: #{transformer_classifier.14} parent=0 // pred_region
    _
  $region37: #{transformer_classifier.14} parent=0 // pred_fallthru
    _

// kernel: transformer_classifier.19
$region0: #{transformer_classifier.19}
  #allocation0 [shape = 'u32[]', space=smem, size = 0x4, offset = 0x4, fixed_abs, tag = 'smem constant byte address 0x4 - core index']
  #allocation1 [shape = 'u32[144,128]{1,0:T(1,128)}', space=vmem, size = 0x12000, scoped, tag = 'internal scratch']
  %s0 = inlined_call_operand.vmem [shape: f32[16,32], index: 0, kind: input, shape index: {}]
  %s1 = inlined_call_operand.vmem [shape: bf16[32,5], index: 1, kind: input, shape index: {}]
  %s2 = inlined_call_operand.vmem [shape: f32[1,5], index: 2, kind: input, shape index: {}]
  %s3 = inlined_call_operand.vmem [shape: f32[16,5], index: 3, kind: output, shape index: {}]
  %s4 = sld [smem:[#allocation0]]
  $region22: #{transformer_classifier.19} parent=0
    _
  %s6 = ssub.s32 1, %s4
  %s7 = scalar_select 0, %s6, %s4
  // Predicated region
  $region2: #{transformer_classifier.19} parent=0 // pred_check
    _
  $region3: #{transformer_classifier.19} parent=0 // pred_check_branch
    %9 = sbr.rel (0) target = $region5
  $region4: #{transformer_classifier.19} parent=0 // pred_region
    _
  $region5: #{transformer_classifier.19} parent=0 // pred_fallthru
    _
  // Predicated region
  $region6: #{transformer_classifier.19} parent=0 // pred_check
    _
  $region7: #{transformer_classifier.19} parent=0 // pred_check_branch
    %11 = sbr.rel (0) target = $region9
  $region8: #{transformer_classifier.19} parent=0 // pred_region
    _
  $region9: #{transformer_classifier.19} parent=0 // pred_fallthru
    _
  // Predicated region
  $region10: #{transformer_classifier.19} parent=0 // pred_check
    _
  $region11: #{transformer_classifier.19} parent=0 // pred_check_branch
    %13 = sbr.rel (0) target = $region13
  $region12: #{transformer_classifier.19} parent=0 // pred_region
    _
  $region13: #{transformer_classifier.19} parent=0 // pred_fallthru
    _
  %v15 = vld [vmem:[%s0] sm:$0xff]
  %v16 = vld [vmem:[%s0 + $0x8] sm:$0xff]
  %v17 = vpack.c.bf16 %v16, %v15
  %v18 = vld [vmem:[%s1] sm:$0xf]
  %v19 = vld [vmem:[%s1 + $0x4] sm:$0xf]
  %v20 = vld [vmem:[%s1 + $0x8] sm:$0xf]
  %v21 = vld [vmem:[%s1 + $0xc] sm:$0xf]
  %v22 = vld [vmem:[%s2] sm:$0x1]
  %v24 = vlaneseq
  %v25 = vshrl.u32 %v24, 7
  %v26 = vsub.s32 0, %v25
  %v27 = vrot.slane %v22, %v26
  %v33 = vunpack.c.l.b16 %v18
  %v34 = vunpack.c.l.b16 %v19
  %v35 = vunpack.c.l.b16 %v20
  %v36 = vunpack.c.l.b16 %v21
  %v37 = vpack.c.b16 %v34, %v33
  %v38 = vpack.c.b16 %v36, %v35
  %vm41 = vcmask 261120
  %v43 = vsel %vm41, %v17, 0
  %45 = vmatprep.subr.bf16.mxu0 0
  %46 = vmatpush1.bf16.msra.mxu0 0
  %47 = vmatprep.subr.bf16.mxu0 0
  %48 = vmatpush1.bf16.msra.mxu0 0
  %49 = vmatprep.subr.bf16.mxu0 0
  %50 = vmatpush1.bf16.msra.mxu0 0
  %51 = vmatprep.subr.bf16.mxu0 0
  %52 = vmatpush1.bf16.msra.mxu0 0
  %53 = vmatprep.subr.bf16.mxu0 0
  %54 = vmatpush1.bf16.msra.mxu0 0
  %55 = vmatprep.subr.bf16.mxu0 0
  %56 = vmatpush1.bf16.msra.mxu0 0
  %57 = vmatprep.subr.bf16.mxu0 0
  %58 = vmatpush1.bf16.msra.mxu0 %v38
  %59 = vmatprep.subr.bf16.mxu0 0
  %60 = vmatpush1.bf16.msra.mxu0 %v37
  %61 = vmatprep.subr.bf16.mxu0 0
  %62 = vmatpush2.bf16.msra.mxu0 0
  %63 = vmatprep.subr.bf16.mxu0 0
  %64 = vmatpush2.bf16.msra.mxu0 0
  %65 = vmatprep.subr.bf16.mxu0 0
  %66 = vmatpush2.bf16.msra.mxu0 0
  %67 = vmatprep.subr.bf16.mxu0 0
  %68 = vmatpush2.bf16.msra.mxu0 0
  %69 = vmatprep.subr.bf16.mxu0 0
  %70 = vmatpush2.bf16.msra.mxu0 0
  %71 = vmatprep.subr.bf16.mxu0 0
  %72 = vmatpush2.bf16.msra.mxu0 0
  %73 = vmatprep.subr.bf16.mxu0 0
  %74 = vmatpush2.bf16.msra.mxu0 0
  %75 = vmatprep.subr.bf16.mxu0 0
  %76 = vmatpush2.bf16.msra.mxu0 0
  %77 = vmatprep.mubr.bf16.mxu0 0
  %78 = vmatmul.mubr.bf16.gmra.mxu0 %v43
  %v79 = vpop.f32.mrf.mxu0
  %v80 = vadd.f32 %v27, %v79
  %v81 = vpop.f32.mrf.mxu0
  %v82 = vpop.f32.mrf.mxu0
  %v83 = vadd.f32 %v27, %v82
  %v84 = vpop.f32.mrf.mxu0
  %85 = vdwg.mxu0
  %vm86 = vcmask 39936
  %87 = vst.msk [vmem:[%s3] sm:$0xff] %vm86, %v80
  %88 = vst.msk [vmem:[%s3 + $0x8] sm:$0xff] %vm86, %v83
  // Predicated region
  $region14: #{transformer_classifier.19} parent=0 // pred_check
    _
  $region15: #{transformer_classifier.19} parent=0 // pred_check_branch
    %90 = sbr.rel (0) target = $region17
  $region16: #{transformer_classifier.19} parent=0 // pred_region
    _
  $region17: #{transformer_classifier.19} parent=0 // pred_fallthru
    _
  // Predicated region
  $region18: #{transformer_classifier.19} parent=0 // pred_check
    _
  $region19: #{transformer_classifier.19} parent=0 // pred_check_branch
    %92 = sbr.rel (0) target = $region21
  $region20: #{transformer_classifier.19} parent=0 // pred_region
    _
  $region21: #{transformer_classifier.19} parent=0 // pred_fallthru
    _

</llo_original>
